<compile_context>
chip_gen: v6e
topology: v6e:2x2x1
jax: 0.10.0
libtpu: 0.0.40
codegen_flags: <defaults>
</compile_context>

<pallas_src>
import jax
import jax.numpy as jnp
from jax import lax
from jax.experimental import pallas as pl
from jax.experimental.pallas import tpu as pltpu

# ---------------- configuration ----------------
B = 2            # batch
N = 8            # number of points (sequence length)
D = 32           # encoder_embed_dim
H = 4            # encoder_attention_heads
HEAD_DIM = D // H
FFN = 64         # encoder_ffn_embed_dim
D4 = 4 * D       # dist_mlp hidden width
DIST_DECAY = 2.0
SCALING = HEAD_DIM ** (-0.5)
LN_EPS = 1e-5
POS_PAD = 8      # pos last dim zero-padded 3 -> 8 (full-dim block, so no (8,128) issue)
BN = B * N

NEG_INF = -jnp.inf   # used only by the pure-JAX reference

# rows of the packed bias/vector slab (each row zero-padded to 128 lanes)
(R_BQKV, R_WD1, R_BD1, R_BD2, R_BOUT, R_BF1, R_BF2,
 R_GATTN, R_BATTN, R_GFIN, R_BFIN) = range(11)
VEC_ROWS = 16


def _layer_norm(v, g, b):
    mu = jnp.mean(v, axis=-1, keepdims=True)
    var = jnp.mean((v - mu) ** 2, axis=-1, keepdims=True)
    return (v - mu) * lax.rsqrt(var + LN_EPS) * g + b


# ---------------- Pallas kernel (whole layer, whole batch, one invocation) ----------------
def distance_transformer_kernel(x_ref, pos_ref, maskf_ref, wA_ref, wB_ref, vecs_ref,
                                out_ref):
    def vrow(r, w):
        return vecs_ref[r:r + 1, 0:w]              # (1, w) static slice of the bias slab

    x3 = x_ref[...]                                # (B, N, D)
    x2d = x3.reshape(BN, D)                        # merge leading dims only (safe reshape)
    pos = pos_ref[...]                             # (B, N, POS_PAD), zero pad beyond dim 3
    maskf = maskf_ref[...]                         # (B, N), 1.0 = padding point

    # ---- packed weights (static slices; no extra DMA channels) ----
    w_qkv = wA_ref[:, 0:3 * D]                     # (D, 3D)   [wq | wk | wv]
    w_out = wA_ref[:, 3 * D:4 * D]                 # (D, D)
    w_f1  = wA_ref[:, 4 * D:4 * D + FFN]           # (D, FFN)
    w_d2  = wB_ref[0:D4, :]                        # (D4, D)
    w_f2  = wB_ref[D4:D4 + FFN, :]                 # (FFN, D)

    b_qkv  = vrow(R_BQKV, 3 * D)
    w_d1   = vrow(R_WD1, D4)
    b_d1   = vrow(R_BD1, D4)
    b_d2   = vrow(R_BD2, D)
    b_out  = vrow(R_BOUT, D)
    b_f1   = vrow(R_BF1, FFN)
    b_f2   = vrow(R_BF2, D)
    g_attn = vrow(R_GATTN, D)
    b_attn = vrow(R_BATTN, D)
    g_fin  = vrow(R_GFIN, D)
    b_fin  = vrow(R_BFIN, D)

    # ---- fused q/k/v projection: one MXU matmul; fold SCALING into q ----
    qkv = jnp.dot(x2d, w_qkv, preferred_element_type=jnp.float32) + b_qkv   # (BN, 3D)
    q = (qkv[:, 0:D] * SCALING).reshape(B, N, D)
    k = qkv[:, D:2 * D].reshape(B, N, D)
    v = qkv[:, 2 * D:3 * D].reshape(B, N, D)

    # ---- pairwise squared distances via Gram matrix (MXU) ----
    pn2 = jnp.sum(pos * pos, axis=-1)                                       # (B, N)
    gram = jnp.einsum('bnd,bmd->bnm', pos, pos,
                      preferred_element_type=jnp.float32)                   # (B, N, N)
    dist2 = pn2[:, :, None] + pn2[:, None, :] - 2.0 * gram
    ii = lax.broadcasted_iota(jnp.int32, (N, N), 0)
    jj = lax.broadcasted_iota(jnp.int32, (N, N), 1)
    off_diag = (ii != jj).astype(jnp.float32)                               # exact 0 on diag
    dist2 = jnp.maximum(dist2, 0.0) * off_diag[None, :, :]
    dist = jnp.sqrt(dist2)                                                  # (B, N, N)
    decay = jnp.exp(dist2 * (-1.0 / DIST_DECAY))                            # (B, N, N)

    # ---- distance-embedding MLP: Linear(1,4D) -> ReLU -> Linear(4D,D) ----
    h1 = jnp.maximum(dist[..., None] * w_d1 + b_d1, 0.0)                    # (B, N, N, D4)
    demb = (jnp.dot(h1.reshape(B * N * N, D4), w_d2,
                    preferred_element_type=jnp.float32) + b_d2).reshape(B, N, N, D)

    # ---- distance-decayed element-wise attention, softmax over key axis j ----
    # logits[b,i,j,d] = decay[b,i,j] * (k[b,i,d] + demb[b,i,j,d]) * (q[b,j,d]*scaling)
    logits = decay[..., None] * (k[:, :, None, :] + demb) * q[:, None, :, :]  # (B,N,N,D)
    valid = 1.0 - maskf[:, :, None] * maskf[:, None, :]                     # (B, N, N)
    mx = jnp.max(logits, axis=2, keepdims=True)
    e = jnp.exp(logits - mx) * valid[..., None]                             # multiplicative mask
    denom = jnp.sum(e, axis=2, keepdims=True)
    wsm = e * pl.reciprocal(denom, approx=True)
    attn = jnp.sum(v[:, None, :, :] * wsm, axis=2)                          # (B, N, D)

    # ---- out_proj, residual + LayerNorm (post-norm), FFN, residual + LayerNorm ----
    attn2d = jnp.dot(attn.reshape(BN, D), w_out,
                     preferred_element_type=jnp.float32) + b_out
    y1 = _layer_norm(x2d + attn2d, g_attn, b_attn)                          # (BN, D)
    hid = jnp.maximum(jnp.dot(y1, w_f1, preferred_element_type=jnp.float32) + b_f1, 0.0)
    ff = jnp.dot(hid, w_f2, preferred_element_type=jnp.float32) + b_f2
    y2 = _layer_norm(y1 + ff, g_fin, b_fin)                                 # (BN, D)

    # ---- lane-dense output slab: (B, N*D), built via lane concatenation ----
    y2b = y2.reshape(B, N, D)
    out_ref[...] = jnp.concatenate([y2b[:, i, :] for i in range(N)], axis=-1)


# ---------------- wrapper ----------------
def _pack_params(p):
    wA = jnp.concatenate([p["wq"], p["wk"], p["wv"], p["wout"], p["wf1"]], axis=1)  # (D,192)
    wB = jnp.concatenate([p["wd2"], p["wf2"]], axis=0)                              # (192,D)

    def row(vec):
        vec = vec.reshape(1, -1).astype(jnp.float32)
        return jnp.pad(vec, ((0, 0), (0, 128 - vec.shape[1])))

    rows = [
        row(jnp.concatenate([p["bq"], p["bk"], p["bv"]], axis=1)),   # R_BQKV
        row(p["wd1"]), row(p["bd1"]), row(p["bd2"]), row(p["bout"]),
        row(p["bf1"]), row(p["bf2"]),
        row(p["g_attn"]), row(p["b_attn"]), row(p["g_fin"]), row(p["b_fin"]),
    ]
    vecs = jnp.concatenate(
        rows + [jnp.zeros((VEC_ROWS - len(rows), 128), jnp.float32)], axis=0)       # (16,128)
    return wA, wB, vecs


@jax.jit
def distance_transformer_layer(x, pos, mask, params):
    pos_pad = jnp.zeros((B, N, POS_PAD), jnp.float32).at[:, :, :3].set(pos)
    maskf = mask.astype(jnp.float32)
    wA, wB, vecs = _pack_params(params)

    def vmem():
        return pl.BlockSpec(memory_space=pltpu.MemorySpace.VMEM)

    out_flat = pl.pallas_call(
        distance_transformer_kernel,
        out_shape=jax.ShapeDtypeStruct((B, N * D), jnp.float32),
        in_specs=[vmem() for _ in range(6)],
        out_specs=vmem(),
    )(x, pos_pad, maskf, wA, wB, vecs)
    return out_flat.reshape(B, N, D)


# ---------------- pure-JAX reference (mirrors the PyTorch forward) ----------------
def reference(x, pos, mask, p):
    q = x @ p["wq"] + p["bq"]
    k = x @ p["wk"] + p["bk"]
    v = x @ p["wv"] + p["bv"]

    dist = jnp.linalg.norm(pos[:, :, None, :] - pos[:, None, :, :], axis=-1)   # (B,N,N)
    h1 = jax.nn.relu(dist[..., None] * p["wd1"][0] + p["bd1"][0])              # (B,N,N,4D)
    demb = h1 @ p["wd2"] + p["bd2"][0]                                         # (B,N,N,D)

    decay = jnp.exp(-(dist ** 2) / DIST_DECAY)
    logits = decay[..., None] * (k[:, :, None, :] + demb) * q[:, None, :, :] * SCALING
    mask2 = mask[:, :, None] & mask[:, None, :]
    logits = jnp.where(mask2[..., None], NEG_INF, logits)
    w = jax.nn.softmax(logits, axis=2)

    attn = jnp.sum(v[:, None, :, :] * w, axis=2)
    attn = attn @ p["wout"] + p["bout"]

    def ln(v_, g, b):
        mu = jnp.mean(v_, axis=-1, keepdims=True)
        var = jnp.mean((v_ - mu) ** 2, axis=-1, keepdims=True)
        return (v_ - mu) * lax.rsqrt(var + LN_EPS) * g + b

    x1 = ln(x + attn, p["g_attn"][0], p["b_attn"][0])
    h = jax.nn.relu(x1 @ p["wf1"] + p["bf1"])
    ff = h @ p["wf2"] + p["bf2"]
    return ln(x1 + ff, p["g_fin"][0], p["b_fin"][0])


# ---------------- parameter init (deterministic, synthetic) ----------------
def init_params(key):
    ks = jax.random.split(key, 24)

    def w(k, fan_in, fan_out, scale=0.1):
        return jax.random.normal(k, (fan_in, fan_out), jnp.float32) * scale

    def bias(k, n, scale=0.01):
        return jax.random.normal(k, (1, n), jnp.float32) * scale

    p = {
        "wq": w(ks[0], D, D),       "bq": bias(ks[1], D),
        "wk": w(ks[2], D, D),       "bk": bias(ks[3], D),
        "wv": w(ks[4], D, D),       "bv": bias(ks[5], D),
        "wd1": w(ks[6], 1, D4),     "bd1": bias(ks[7], D4),
        "wd2": w(ks[8], D4, D),     "bd2": bias(ks[9], D),
        "wout": w(ks[10], D, D),    "bout": bias(ks[11], D),
        "g_attn": 1.0 + 0.1 * jax.random.normal(ks[12], (1, D), jnp.float32),
        "b_attn": bias(ks[13], D),
        "wf1": w(ks[14], D, FFN),   "bf1": bias(ks[15], FFN),
        "wf2": w(ks[16], FFN, D),   "bf2": bias(ks[17], D),
        "g_fin": 1.0 + 0.1 * jax.random.normal(ks[18], (1, D), jnp.float32),
        "b_fin": bias(ks[19], D),
    }
    return p


if __name__ == "__main__":
    key = jax.random.PRNGKey(0)
    kx, kpos, kp = jax.random.split(key, 3)

    x = jax.random.normal(kx, (B, N, D), jnp.float32)
    pos = jax.random.normal(kpos, (B, N, 3), jnp.float32)
    # padding mask: last points of each cloud are "padding" (True = masked)
    valid_len = jnp.array([6, 7])
    mask = jnp.arange(N)[None, :] >= valid_len[:, None]     # (B, N) bool

    params = init_params(kp)

    # TODO(synk): dropout is treated as identity (inference mode), matching training=False.
    out = distance_transformer_layer(x, pos, mask, params)
    out = jax.block_until_ready(out)

    ref = reference(x, pos, mask, params)
    assert not bool(jnp.any(jnp.isnan(out))), "NaN in kernel output"
    assert jnp.allclose(out, ref, atol=1e-3, rtol=1e-3), (
        f"mismatch, max abs diff = {float(jnp.max(jnp.abs(out - ref)))}"
    )
    print("KERNEL_OK")
</pallas_src>

<mosaic_0001>
module attributes {stable_mosaic.version = 11 : i64} {
  func.func @distance_transformer_kernel(%arg0: memref<2x8x32xf32, #tpu.memory_space<vmem>>, %arg1: memref<2x8x8xf32, #tpu.memory_space<vmem>>, %arg2: memref<2x8xf32, #tpu.memory_space<vmem>>, %arg3: memref<32x192xf32, #tpu.memory_space<vmem>>, %arg4: memref<192x32xf32, #tpu.memory_space<vmem>>, %arg5: memref<16x128xf32, #tpu.memory_space<vmem>>, %arg6: memref<2x256xf32, #tpu.memory_space<vmem>>) attributes {dimension_semantics = [], scalar_prefetch = 0 : i64, scratch_operands = 0 : i64, tpu.core_type = #tpu.core_type<tc>} {
    %c0 = arith.constant 0 : index
    %c0_0 = arith.constant 0 : index
    %c0_1 = arith.constant 0 : index
    %0 = vector.load %arg0[%c0, %c0_0, %c0_1] : memref<2x8x32xf32, #tpu.memory_space<vmem>>, vector<2x8x32xf32>
    %1 = vector.shape_cast %0 : vector<2x8x32xf32> to vector<16x32xf32>
    %c0_2 = arith.constant 0 : index
    %c0_3 = arith.constant 0 : index
    %c0_4 = arith.constant 0 : index
    %2 = vector.load %arg1[%c0_2, %c0_3, %c0_4] : memref<2x8x8xf32, #tpu.memory_space<vmem>>, vector<2x8x8xf32>
    %c0_5 = arith.constant 0 : index
    %c0_6 = arith.constant 0 : index
    %3 = vector.load %arg2[%c0_5, %c0_6] : memref<2x8xf32, #tpu.memory_space<vmem>>, vector<2x8xf32>
    %c0_7 = arith.constant 0 : index
    %c0_8 = arith.constant 0 : index
    %4 = vector.load %arg3[%c0_7, %c0_8] : memref<32x192xf32, #tpu.memory_space<vmem>>, vector<32x96xf32>
    %c0_9 = arith.constant 0 : index
    %c96 = arith.constant 96 : index
    %5 = vector.load %arg3[%c0_9, %c96] : memref<32x192xf32, #tpu.memory_space<vmem>>, vector<32x32xf32>
    %c0_10 = arith.constant 0 : index
    %c128 = arith.constant 128 : index
    %6 = vector.load %arg3[%c0_10, %c128] : memref<32x192xf32, #tpu.memory_space<vmem>>, vector<32x64xf32>
    %c0_11 = arith.constant 0 : index
    %c0_12 = arith.constant 0 : index
    %7 = vector.load %arg4[%c0_11, %c0_12] : memref<192x32xf32, #tpu.memory_space<vmem>>, vector<128x32xf32>
    %c128_13 = arith.constant 128 : index
    %c0_14 = arith.constant 0 : index
    %8 = vector.load %arg4[%c128_13, %c0_14] : memref<192x32xf32, #tpu.memory_space<vmem>>, vector<64x32xf32>
    %c0_15 = arith.constant 0 : index
    %c0_16 = arith.constant 0 : index
    %9 = vector.load %arg5[%c0_15, %c0_16] : memref<16x128xf32, #tpu.memory_space<vmem>>, vector<1x96xf32>
    %c1 = arith.constant 1 : index
    %c0_17 = arith.constant 0 : index
    %10 = vector.load %arg5[%c1, %c0_17] : memref<16x128xf32, #tpu.memory_space<vmem>>, vector<1x128xf32>
    %c2 = arith.constant 2 : index
    %c0_18 = arith.constant 0 : index
    %11 = vector.load %arg5[%c2, %c0_18] : memref<16x128xf32, #tpu.memory_space<vmem>>, vector<1x128xf32>
    %c3 = arith.constant 3 : index
    %c0_19 = arith.constant 0 : index
    %12 = vector.load %arg5[%c3, %c0_19] : memref<16x128xf32, #tpu.memory_space<vmem>>, vector<1x32xf32>
    %c4 = arith.constant 4 : index
    %c0_20 = arith.constant 0 : index
    %13 = vector.load %arg5[%c4, %c0_20] : memref<16x128xf32, #tpu.memory_space<vmem>>, vector<1x32xf32>
    %c5 = arith.constant 5 : index
    %c0_21 = arith.constant 0 : index
    %14 = vector.load %arg5[%c5, %c0_21] : memref<16x128xf32, #tpu.memory_space<vmem>>, vector<1x64xf32>
    %c6 = arith.constant 6 : index
    %c0_22 = arith.constant 0 : index
    %15 = vector.load %arg5[%c6, %c0_22] : memref<16x128xf32, #tpu.memory_space<vmem>>, vector<1x32xf32>
    %c7 = arith.constant 7 : index
    %c0_23 = arith.constant 0 : index
    %16 = vector.load %arg5[%c7, %c0_23] : memref<16x128xf32, #tpu.memory_space<vmem>>, vector<1x32xf32>
    %c8 = arith.constant 8 : index
    %c0_24 = arith.constant 0 : index
    %17 = vector.load %arg5[%c8, %c0_24] : memref<16x128xf32, #tpu.memory_space<vmem>>, vector<1x32xf32>
    %c9 = arith.constant 9 : index
    %c0_25 = arith.constant 0 : index
    %18 = vector.load %arg5[%c9, %c0_25] : memref<16x128xf32, #tpu.memory_space<vmem>>, vector<1x32xf32>
    %c10 = arith.constant 10 : index
    %c0_26 = arith.constant 0 : index
    %19 = vector.load %arg5[%c10, %c0_26] : memref<16x128xf32, #tpu.memory_space<vmem>>, vector<1x32xf32>
    %cst = arith.constant dense<0.000000e+00> : vector<16x96xf32>
    %20 = tpu.matmul %1, %4, %cst {dimension_numbers = #tpu.dot_dimension_numbers<[1], [0], [0], [1], [0, 0, 1, 1], [], []>} : vector<16x32xf32>, vector<32x96xf32>, vector<16x96xf32> -> vector<16x96xf32>
    %21 = vector.broadcast %9 : vector<1x96xf32> to vector<16x96xf32>
    %22 = arith.addf %20, %21 : vector<16x96xf32>
    %23 = vector.extract_strided_slice %22 {offsets = [0, 0], sizes = [16, 32], strides = [1, 1]} : vector<16x96xf32> to vector<16x32xf32>
    %cst_27 = arith.constant 0.353553385 : f32
    %24 = vector.broadcast %cst_27 : f32 to vector<16x32xf32>
    %25 = arith.mulf %23, %24 : vector<16x32xf32>
    %26 = vector.shape_cast %25 : vector<16x32xf32> to vector<2x8x32xf32>
    %27 = vector.extract_strided_slice %22 {offsets = [0, 32], sizes = [16, 32], strides = [1, 1]} : vector<16x96xf32> to vector<16x32xf32>
    %28 = vector.shape_cast %27 : vector<16x32xf32> to vector<2x8x32xf32>
    %29 = vector.extract_strided_slice %22 {offsets = [0, 64], sizes = [16, 32], strides = [1, 1]} : vector<16x96xf32> to vector<16x32xf32>
    %30 = vector.shape_cast %29 : vector<16x32xf32> to vector<2x8x32xf32>
    %31 = arith.mulf %2, %2 : vector<2x8x8xf32>
    %cst_28 = arith.constant dense<0.000000e+00> : vector<2x8xf32>
    %32 = vector.multi_reduction <add>, %31, %cst_28 [2] : vector<2x8x8xf32> to vector<2x8xf32>
    "tpu.trace_start"() <{level = 10 : i32, message = "bnd,bmd->bnm"}> : () -> ()
    %cst_29 = arith.constant dense<0.000000e+00> : vector<2x8x8xf32>
    %33 = tpu.matmul %2, %2, %cst_29 {dimension_numbers = #tpu.dot_dimension_numbers<[2], [2], [1], [1], [0, 0, 0, 1, 1, 1], [0], [0]>} : vector<2x8x8xf32>, vector<2x8x8xf32>, vector<2x8x8xf32> -> vector<2x8x8xf32>
    "tpu.trace_stop"() : () -> ()
    %34 = vector.shape_cast %32 : vector<2x8xf32> to vector<2x8x1xf32>
    %35 = vector.shape_cast %32 : vector<2x8xf32> to vector<2x1x8xf32>
    %36 = vector.broadcast %34 : vector<2x8x1xf32> to vector<2x8x8xf32>
    %37 = vector.broadcast %35 : vector<2x1x8xf32> to vector<2x8x8xf32>
    %38 = arith.addf %36, %37 : vector<2x8x8xf32>
    %cst_30 = arith.constant 2.000000e+00 : f32
    %39 = vector.broadcast %cst_30 : f32 to vector<2x8x8xf32>
    %40 = arith.mulf %39, %33 : vector<2x8x8xf32>
    %41 = arith.subf %38, %40 : vector<2x8x8xf32>
    %42 = tpu.iota {dimensions = array<i32: 0>} : vector<8x8xi32>
    %43 = tpu.iota {dimensions = array<i32: 1>} : vector<8x8xi32>
    %44 = arith.cmpi ne, %42, %43 : vector<8x8xi32>
    %45 = arith.extui %44 : vector<8x8xi1> to vector<8x8xi32>
    %46 = arith.sitofp %45 : vector<8x8xi32> to vector<8x8xf32>
    %cst_31 = arith.constant 0.000000e+00 : f32
    %47 = vector.broadcast %cst_31 : f32 to vector<2x8x8xf32>
    %48 = arith.maximumf %41, %47 : vector<2x8x8xf32>
    %49 = vector.shape_cast %46 : vector<8x8xf32> to vector<1x8x8xf32>
    %50 = vector.broadcast %49 : vector<1x8x8xf32> to vector<2x8x8xf32>
    %51 = arith.mulf %48, %50 : vector<2x8x8xf32>
    %52 = math.sqrt %51 : vector<2x8x8xf32>
    %cst_32 = arith.constant -5.000000e-01 : f32
    %53 = vector.broadcast %cst_32 : f32 to vector<2x8x8xf32>
    %54 = arith.mulf %51, %53 : vector<2x8x8xf32>
    %55 = math.exp %54 : vector<2x8x8xf32>
    %56 = vector.shape_cast %52 : vector<2x8x8xf32> to vector<2x8x8x1xf32>
    %57 = vector.shape_cast %10 : vector<1x128xf32> to vector<1x1x1x128xf32>
    %58 = vector.broadcast %56 : vector<2x8x8x1xf32> to vector<2x8x8x128xf32>
    %59 = vector.broadcast %57 : vector<1x1x1x128xf32> to vector<2x8x8x128xf32>
    %60 = arith.mulf %58, %59 : vector<2x8x8x128xf32>
    %61 = vector.shape_cast %11 : vector<1x128xf32> to vector<1x1x1x128xf32>
    %62 = vector.broadcast %61 : vector<1x1x1x128xf32> to vector<2x8x8x128xf32>
    %63 = arith.addf %60, %62 : vector<2x8x8x128xf32>
    %cst_33 = arith.constant 0.000000e+00 : f32
    %64 = vector.broadcast %cst_33 : f32 to vector<2x8x8x128xf32>
    %65 = arith.maximumf %63, %64 : vector<2x8x8x128xf32>
    %66 = vector.shape_cast %65 : vector<2x8x8x128xf32> to vector<128x128xf32>
    %cst_34 = arith.constant dense<0.000000e+00> : vector<128x32xf32>
    %67 = tpu.matmul %66, %7, %cst_34 {dimension_numbers = #tpu.dot_dimension_numbers<[1], [0], [0], [1], [0, 0, 1, 1], [], []>} : vector<128x128xf32>, vector<128x32xf32>, vector<128x32xf32> -> vector<128x32xf32>
    %68 = vector.broadcast %12 : vector<1x32xf32> to vector<128x32xf32>
    %69 = arith.addf %67, %68 : vector<128x32xf32>
    %70 = vector.shape_cast %69 : vector<128x32xf32> to vector<2x8x8x32xf32>
    %71 = vector.shape_cast %55 : vector<2x8x8xf32> to vector<2x8x8x1xf32>
    %72 = vector.shape_cast %28 : vector<2x8x32xf32> to vector<2x8x1x32xf32>
    %73 = vector.broadcast %72 : vector<2x8x1x32xf32> to vector<2x8x8x32xf32>
    %74 = arith.addf %73, %70 : vector<2x8x8x32xf32>
    %75 = vector.broadcast %71 : vector<2x8x8x1xf32> to vector<2x8x8x32xf32>
    %76 = arith.mulf %75, %74 : vector<2x8x8x32xf32>
    %77 = vector.shape_cast %26 : vector<2x8x32xf32> to vector<2x1x8x32xf32>
    %78 = vector.broadcast %77 : vector<2x1x8x32xf32> to vector<2x8x8x32xf32>
    %79 = arith.mulf %76, %78 : vector<2x8x8x32xf32>
    %80 = vector.shape_cast %3 : vector<2x8xf32> to vector<2x8x1xf32>
    %81 = vector.shape_cast %3 : vector<2x8xf32> to vector<2x1x8xf32>
    %82 = vector.broadcast %80 : vector<2x8x1xf32> to vector<2x8x8xf32>
    %83 = vector.broadcast %81 : vector<2x1x8xf32> to vector<2x8x8xf32>
    %84 = arith.mulf %82, %83 : vector<2x8x8xf32>
    %cst_35 = arith.constant 1.000000e+00 : f32
    %85 = vector.broadcast %cst_35 : f32 to vector<2x8x8xf32>
    %86 = arith.subf %85, %84 : vector<2x8x8xf32>
    %cst_36 = arith.constant dense<0xFF800000> : vector<2x8x32xf32>
    %87 = vector.multi_reduction <maximumf>, %79, %cst_36 [2] : vector<2x8x8x32xf32> to vector<2x8x32xf32>
    %88 = vector.shape_cast %87 : vector<2x8x32xf32> to vector<2x8x1x32xf32>
    %89 = vector.broadcast %88 : vector<2x8x1x32xf32> to vector<2x8x8x32xf32>
    %90 = arith.subf %79, %89 : vector<2x8x8x32xf32>
    %91 = math.exp %90 : vector<2x8x8x32xf32>
    %92 = vector.shape_cast %86 : vector<2x8x8xf32> to vector<2x8x8x1xf32>
    %93 = vector.broadcast %92 : vector<2x8x8x1xf32> to vector<2x8x8x32xf32>
    %94 = arith.mulf %91, %93 : vector<2x8x8x32xf32>
    %cst_37 = arith.constant dense<0.000000e+00> : vector<2x8x32xf32>
    %95 = vector.multi_reduction <add>, %94, %cst_37 [2] : vector<2x8x8x32xf32> to vector<2x8x32xf32>
    %96 = vector.shape_cast %95 : vector<2x8x32xf32> to vector<2x8x1x32xf32>
    %97 = tpu.reciprocal %96 {approx = true} : vector<2x8x1x32xf32> -> vector<2x8x1x32xf32>
    %98 = vector.broadcast %97 : vector<2x8x1x32xf32> to vector<2x8x8x32xf32>
    %99 = arith.mulf %94, %98 : vector<2x8x8x32xf32>
    %100 = vector.shape_cast %30 : vector<2x8x32xf32> to vector<2x1x8x32xf32>
    %101 = vector.broadcast %100 : vector<2x1x8x32xf32> to vector<2x8x8x32xf32>
    %102 = arith.mulf %101, %99 : vector<2x8x8x32xf32>
    %cst_38 = arith.constant dense<0.000000e+00> : vector<2x8x32xf32>
    %103 = vector.multi_reduction <add>, %102, %cst_38 [2] : vector<2x8x8x32xf32> to vector<2x8x32xf32>
    %104 = vector.shape_cast %103 : vector<2x8x32xf32> to vector<16x32xf32>
    %cst_39 = arith.constant dense<0.000000e+00> : vector<16x32xf32>
    %105 = tpu.matmul %104, %5, %cst_39 {dimension_numbers = #tpu.dot_dimension_numbers<[1], [0], [0], [1], [0, 0, 1, 1], [], []>} : vector<16x32xf32>, vector<32x32xf32>, vector<16x32xf32> -> vector<16x32xf32>
    %106 = vector.broadcast %13 : vector<1x32xf32> to vector<16x32xf32>
    %107 = arith.addf %105, %106 : vector<16x32xf32>
    %108 = arith.addf %1, %107 : vector<16x32xf32>
    %cst_40 = arith.constant dense<0.000000e+00> : vector<16xf32>
    %109 = vector.multi_reduction <add>, %108, %cst_40 [1] : vector<16x32xf32> to vector<16xf32>
    %110 = vector.shape_cast %109 : vector<16xf32> to vector<16x1xf32>
    %cst_41 = arith.constant 3.200000e+01 : f32
    %111 = vector.broadcast %cst_41 : f32 to vector<16x1xf32>
    %112 = arith.divf %110, %111 : vector<16x1xf32>
    %113 = vector.broadcast %112 : vector<16x1xf32> to vector<16x32xf32>
    %114 = arith.subf %108, %113 : vector<16x32xf32>
    %115 = arith.mulf %114, %114 : vector<16x32xf32>
    %cst_42 = arith.constant dense<0.000000e+00> : vector<16xf32>
    %116 = vector.multi_reduction <add>, %115, %cst_42 [1] : vector<16x32xf32> to vector<16xf32>
    %117 = vector.shape_cast %116 : vector<16xf32> to vector<16x1xf32>
    %cst_43 = arith.constant 3.200000e+01 : f32
    %118 = vector.broadcast %cst_43 : f32 to vector<16x1xf32>
    %119 = arith.divf %117, %118 : vector<16x1xf32>
    %120 = vector.broadcast %112 : vector<16x1xf32> to vector<16x32xf32>
    %121 = arith.subf %108, %120 : vector<16x32xf32>
    %cst_44 = arith.constant 9.99999974E-6 : f32
    %122 = vector.broadcast %cst_44 : f32 to vector<16x1xf32>
    %123 = arith.addf %119, %122 : vector<16x1xf32>
    %124 = math.rsqrt %123 : vector<16x1xf32>
    %125 = vector.broadcast %124 : vector<16x1xf32> to vector<16x32xf32>
    %126 = arith.mulf %121, %125 : vector<16x32xf32>
    %127 = vector.broadcast %16 : vector<1x32xf32> to vector<16x32xf32>
    %128 = arith.mulf %126, %127 : vector<16x32xf32>
    %129 = vector.broadcast %17 : vector<1x32xf32> to vector<16x32xf32>
    %130 = arith.addf %128, %129 : vector<16x32xf32>
    %cst_45 = arith.constant dense<0.000000e+00> : vector<16x64xf32>
    %131 = tpu.matmul %130, %6, %cst_45 {dimension_numbers = #tpu.dot_dimension_numbers<[1], [0], [0], [1], [0, 0, 1, 1], [], []>} : vector<16x32xf32>, vector<32x64xf32>, vector<16x64xf32> -> vector<16x64xf32>
    %132 = vector.broadcast %14 : vector<1x64xf32> to vector<16x64xf32>
    %133 = arith.addf %131, %132 : vector<16x64xf32>
    %cst_46 = arith.constant 0.000000e+00 : f32
    %134 = vector.broadcast %cst_46 : f32 to vector<16x64xf32>
    %135 = arith.maximumf %133, %134 : vector<16x64xf32>
    %cst_47 = arith.constant dense<0.000000e+00> : vector<16x32xf32>
    %136 = tpu.matmul %135, %8, %cst_47 {dimension_numbers = #tpu.dot_dimension_numbers<[1], [0], [0], [1], [0, 0, 1, 1], [], []>} : vector<16x64xf32>, vector<64x32xf32>, vector<16x32xf32> -> vector<16x32xf32>
    %137 = vector.broadcast %15 : vector<1x32xf32> to vector<16x32xf32>
    %138 = arith.addf %136, %137 : vector<16x32xf32>
    %139 = arith.addf %130, %138 : vector<16x32xf32>
    %cst_48 = arith.constant dense<0.000000e+00> : vector<16xf32>
    %140 = vector.multi_reduction <add>, %139, %cst_48 [1] : vector<16x32xf32> to vector<16xf32>
    %141 = vector.shape_cast %140 : vector<16xf32> to vector<16x1xf32>
    %cst_49 = arith.constant 3.200000e+01 : f32
    %142 = vector.broadcast %cst_49 : f32 to vector<16x1xf32>
    %143 = arith.divf %141, %142 : vector<16x1xf32>
    %144 = vector.broadcast %143 : vector<16x1xf32> to vector<16x32xf32>
    %145 = arith.subf %139, %144 : vector<16x32xf32>
    %146 = arith.mulf %145, %145 : vector<16x32xf32>
    %cst_50 = arith.constant dense<0.000000e+00> : vector<16xf32>
    %147 = vector.multi_reduction <add>, %146, %cst_50 [1] : vector<16x32xf32> to vector<16xf32>
    %148 = vector.shape_cast %147 : vector<16xf32> to vector<16x1xf32>
    %cst_51 = arith.constant 3.200000e+01 : f32
    %149 = vector.broadcast %cst_51 : f32 to vector<16x1xf32>
    %150 = arith.divf %148, %149 : vector<16x1xf32>
    %151 = vector.broadcast %143 : vector<16x1xf32> to vector<16x32xf32>
    %152 = arith.subf %139, %151 : vector<16x32xf32>
    %cst_52 = arith.constant 9.99999974E-6 : f32
    %153 = vector.broadcast %cst_52 : f32 to vector<16x1xf32>
    %154 = arith.addf %150, %153 : vector<16x1xf32>
    %155 = math.rsqrt %154 : vector<16x1xf32>
    %156 = vector.broadcast %155 : vector<16x1xf32> to vector<16x32xf32>
    %157 = arith.mulf %152, %156 : vector<16x32xf32>
    %158 = vector.broadcast %18 : vector<1x32xf32> to vector<16x32xf32>
    %159 = arith.mulf %157, %158 : vector<16x32xf32>
    %160 = vector.broadcast %19 : vector<1x32xf32> to vector<16x32xf32>
    %161 = arith.addf %159, %160 : vector<16x32xf32>
    %162 = vector.shape_cast %161 : vector<16x32xf32> to vector<2x8x32xf32>
    %163 = vector.extract_strided_slice %162 {offsets = [0, 0, 0], sizes = [2, 1, 32], strides = [1, 1, 1]} : vector<2x8x32xf32> to vector<2x1x32xf32>
    %164 = vector.shape_cast %163 : vector<2x1x32xf32> to vector<2x32xf32>
    %165 = vector.extract_strided_slice %162 {offsets = [0, 1, 0], sizes = [2, 1, 32], strides = [1, 1, 1]} : vector<2x8x32xf32> to vector<2x1x32xf32>
    %166 = vector.shape_cast %165 : vector<2x1x32xf32> to vector<2x32xf32>
    %167 = vector.extract_strided_slice %162 {offsets = [0, 2, 0], sizes = [2, 1, 32], strides = [1, 1, 1]} : vector<2x8x32xf32> to vector<2x1x32xf32>
    %168 = vector.shape_cast %167 : vector<2x1x32xf32> to vector<2x32xf32>
    %169 = vector.extract_strided_slice %162 {offsets = [0, 3, 0], sizes = [2, 1, 32], strides = [1, 1, 1]} : vector<2x8x32xf32> to vector<2x1x32xf32>
    %170 = vector.shape_cast %169 : vector<2x1x32xf32> to vector<2x32xf32>
    %171 = vector.extract_strided_slice %162 {offsets = [0, 4, 0], sizes = [2, 1, 32], strides = [1, 1, 1]} : vector<2x8x32xf32> to vector<2x1x32xf32>
    %172 = vector.shape_cast %171 : vector<2x1x32xf32> to vector<2x32xf32>
    %173 = vector.extract_strided_slice %162 {offsets = [0, 5, 0], sizes = [2, 1, 32], strides = [1, 1, 1]} : vector<2x8x32xf32> to vector<2x1x32xf32>
    %174 = vector.shape_cast %173 : vector<2x1x32xf32> to vector<2x32xf32>
    %175 = vector.extract_strided_slice %162 {offsets = [0, 6, 0], sizes = [2, 1, 32], strides = [1, 1, 1]} : vector<2x8x32xf32> to vector<2x1x32xf32>
    %176 = vector.shape_cast %175 : vector<2x1x32xf32> to vector<2x32xf32>
    %177 = vector.extract_strided_slice %162 {offsets = [0, 7, 0], sizes = [2, 1, 32], strides = [1, 1, 1]} : vector<2x8x32xf32> to vector<2x1x32xf32>
    %178 = vector.shape_cast %177 : vector<2x1x32xf32> to vector<2x32xf32>
    %179 = tpu.concatenate %164, %166, %168, %170, %172, %174, %176, %178 in 1 : vector<2x32xf32>, vector<2x32xf32>, vector<2x32xf32>, vector<2x32xf32>, vector<2x32xf32>, vector<2x32xf32>, vector<2x32xf32>, vector<2x32xf32> -> vector<2x256xf32>
    %c0_53 = arith.constant 0 : index
    %c0_54 = arith.constant 0 : index
    %180 = vector.load %arg6[%c0_53, %c0_54] : memref<2x256xf32, #tpu.memory_space<vmem>>, vector<2x256xf32>
    tpu.vector_store %arg6[%c0_53, %c0_54], %179 {strides = array<i32>} : memref<2x256xf32, #tpu.memory_space<vmem>>, vector<2x256xf32>,
    return
  }
}

</mosaic_0001>

<llo_original>
// kernel: distance_transformer_layer.1
$region0: #{distance_transformer_layer.1}
  #allocation0 [shape = 'u32[]', space=smem, size = 0x4, offset = 0x4, fixed_abs, tag = 'smem constant byte address 0x4 - core index']
  #allocation1 [shape = 'u32[144,128]{1,0:T(1,128)}', space=vmem, size = 0x12000, scoped, tag = 'internal scratch']
  %s0 = inlined_call_operand.vmem [shape: f32[2,8,32], index: 0, kind: input, shape index: {}]
  %s1 = inlined_call_operand.vmem [shape: f32[2,8,8], index: 1, kind: input, shape index: {}]
  %s2 = inlined_call_operand.vmem [shape: f32[2,8], index: 2, kind: input, shape index: {}]
  %s3 = inlined_call_operand.vmem [shape: f32[32,192], index: 3, kind: input, shape index: {}]
  %s4 = inlined_call_operand.vmem [shape: f32[192,32], index: 4, kind: input, shape index: {}]
  %s5 = inlined_call_operand.vmem [shape: f32[16,128], index: 5, kind: input, shape index: {}]
  %s6 = inlined_call_operand.vmem [shape: f32[2,256], index: 6, kind: output, shape index: {}]
  %s7 = sld [smem:[#allocation0]]
  $region34: #{distance_transformer_layer.1} parent=0
    _
  %s9 = ssub.s32 1, %s7
  %s10 = scalar_select 0, %s9, %s7
  // Predicated region
  $region2: #{distance_transformer_layer.1} parent=0 // pred_check
    _
  $region3: #{distance_transformer_layer.1} parent=0 // pred_check_branch
    %12 = sbr.rel (0) target = $region5
  $region4: #{distance_transformer_layer.1} parent=0 // pred_region
    _
  $region5: #{distance_transformer_layer.1} parent=0 // pred_fallthru
    _
  // Predicated region
  $region6: #{distance_transformer_layer.1} parent=0 // pred_check
    _
  $region7: #{distance_transformer_layer.1} parent=0 // pred_check_branch
    %14 = sbr.rel (0) target = $region9
  $region8: #{distance_transformer_layer.1} parent=0 // pred_region
    _
  $region9: #{distance_transformer_layer.1} parent=0 // pred_fallthru
    _
  // Predicated region
  $region10: #{distance_transformer_layer.1} parent=0 // pred_check
    _
  $region11: #{distance_transformer_layer.1} parent=0 // pred_check_branch
    %16 = sbr.rel (0) target = $region13
  $region12: #{distance_transformer_layer.1} parent=0 // pred_region
    _
  $region13: #{distance_transformer_layer.1} parent=0 // pred_fallthru
    _
  // Predicated region
  $region14: #{distance_transformer_layer.1} parent=0 // pred_check
    _
  $region15: #{distance_transformer_layer.1} parent=0 // pred_check_branch
    %18 = sbr.rel (0) target = $region17
  $region16: #{distance_transformer_layer.1} parent=0 // pred_region
    _
  $region17: #{distance_transformer_layer.1} parent=0 // pred_fallthru
    _
  // Predicated region
  $region18: #{distance_transformer_layer.1} parent=0 // pred_check
    _
  $region19: #{distance_transformer_layer.1} parent=0 // pred_check_branch
    %20 = sbr.rel (0) target = $region21
  $region20: #{distance_transformer_layer.1} parent=0 // pred_region
    _
  $region21: #{distance_transformer_layer.1} parent=0 // pred_fallthru
    _
  // Predicated region
  $region22: #{distance_transformer_layer.1} parent=0 // pred_check
    _
  $region23: #{distance_transformer_layer.1} parent=0 // pred_check_branch
    %22 = sbr.rel (0) target = $region25
  $region24: #{distance_transformer_layer.1} parent=0 // pred_region
    _
  $region25: #{distance_transformer_layer.1} parent=0 // pred_fallthru
    _
  %v23 = vld [vmem:[%s0] sm:$0xff]
  %v24 = vld [vmem:[%s0 + $0x8] sm:$0xff]
  %v25 = vld [vmem:[%s1] sm:$0xff]
  %v26 = vld [vmem:[%s1 + $0x8] sm:$0xff]
  %v27 = vld [vmem:[%s2] sm:$0x3]
  %v28 = vld [vmem:[%s3] sm:$0xff]
  %v29 = vld [vmem:[%s3 + $0x10] sm:$0xff]
  %v30 = vld [vmem:[%s3 + $0x20] sm:$0xff]
  %v31 = vld [vmem:[%s3 + $0x30] sm:$0xff]
  %v32 = vld [vmem:[%s3 + $0x8] sm:$0xff]
  %v33 = vld [vmem:[%s3 + $0x18] sm:$0xff]
  %v34 = vld [vmem:[%s3 + $0x28] sm:$0xff]
  %v35 = vld [vmem:[%s3 + $0x38] sm:$0xff]
  %v36 = vld [vmem:[%s4] sm:$0xff]
  %v37 = vld [vmem:[%s4 + $0x8] sm:$0xff]
  %v38 = vld [vmem:[%s4 + $0x10] sm:$0xff]
  %v39 = vld [vmem:[%s4 + $0x18] sm:$0xff]
  %v40 = vld [vmem:[%s4 + $0x20] sm:$0xff]
  %v41 = vld [vmem:[%s4 + $0x28] sm:$0xff]
  %v42 = vld [vmem:[%s4 + $0x30] sm:$0xff]
  %v43 = vld [vmem:[%s4 + $0x38] sm:$0xff]
  %v44 = vld [vmem:[%s4 + $0x40] sm:$0xff]
  %v45 = vld [vmem:[%s4 + $0x48] sm:$0xff]
  %v46 = vld [vmem:[%s4 + $0x50] sm:$0xff]
  %v47 = vld [vmem:[%s4 + $0x58] sm:$0xff]
  %v48 = vld [vmem:[%s4 + $0x60] sm:$0xff]
  %v49 = vld [vmem:[%s4 + $0x68] sm:$0xff]
  %v50 = vld [vmem:[%s4 + $0x70] sm:$0xff]
  %v51 = vld [vmem:[%s4 + $0x78] sm:$0xff]
  %v52 = vld [vmem:[%s4 + $0x80] sm:$0xff]
  %v53 = vld [vmem:[%s4 + $0x88] sm:$0xff]
  %v54 = vld [vmem:[%s4 + $0x90] sm:$0xff]
  %v55 = vld [vmem:[%s4 + $0x98] sm:$0xff]
  %v56 = vld [vmem:[%s4 + $0xa0] sm:$0xff]
  %v57 = vld [vmem:[%s4 + $0xa8] sm:$0xff]
  %v58 = vld [vmem:[%s4 + $0xb0] sm:$0xff]
  %v59 = vld [vmem:[%s4 + $0xb8] sm:$0xff]
  %v60 = vld [vmem:[%s5] sm:$0x1]
  %v61 = vld [vmem:[%s5 + $0x1] sm:$0x1]
  %v62 = vld [vmem:[%s5 + $0x2] sm:$0x1]
  %v63 = vld [vmem:[%s5 + $0x3] sm:$0x1]
  %v64 = vld [vmem:[%s5 + $0x4] sm:$0x1]
  %v65 = vld [vmem:[%s5 + $0x5] sm:$0x1]
  %v66 = vld [vmem:[%s5 + $0x6] sm:$0x1]
  %v67 = vld [vmem:[%s5 + $0x7] sm:$0x1]
  %v68 = vld [vmem:[%s5 + $0x8] sm:$0x1]
  %v69 = vld [vmem:[%s5 + $0x9] sm:$0x1]
  %v70 = vld [vmem:[%s5 + $0xa] sm:$0x1]
  %v71 = vlaneseq
  %v72 = vshrl.u32 %v71, 7
  %v73 = vsub.s32 0, %v72
  %v74 = vrot.slane %v60, %v73
  %vm75 = vcmask 261120
  %v77 = vsel %vm75, %v23, 0
  %v80 = vsel %vm75, %v24, 0
  %82 = vmatprep.subr.mxu0 0.0
  %83 = vmatpush1.msra.mxu0 0.0
  %84 = vmatprep.subr.mxu0 0.0
  %85 = vmatpush1.msra.mxu0 0.0
  %86 = vmatprep.subr.mxu0 0.0
  %87 = vmatpush1.msra.mxu0 0.0
  %88 = vmatprep.subr.mxu0 0.0
  %89 = vmatpush1.msra.mxu0 0.0
  %90 = vmatprep.subr.mxu0 0.0
  %91 = vmatpush1.msra.mxu0 0.0
  %92 = vmatprep.subr.mxu0 0.0
  %93 = vmatpush1.msra.mxu0 0.0
  %94 = vmatprep.subr.mxu0 0.0
  %95 = vmatpush1.msra.mxu0 0.0
  %96 = vmatprep.subr.mxu0 0.0
  %97 = vmatpush1.msra.mxu0 0.0
  %98 = vmatprep.subr.mxu0 0.0
  %99 = vmatpush1.msra.mxu0 0.0
  %100 = vmatprep.subr.mxu0 0.0
  %101 = vmatpush1.msra.mxu0 0.0
  %102 = vmatprep.subr.mxu0 0.0
  %103 = vmatpush1.msra.mxu0 0.0
  %104 = vmatprep.subr.mxu0 0.0
  %105 = vmatpush1.msra.mxu0 0.0
  %106 = vmatprep.subr.mxu0 0.0
  %107 = vmatpush1.msra.mxu0 %v31
  %108 = vmatprep.subr.mxu0 0.0
  %109 = vmatpush1.msra.mxu0 %v30
  %110 = vmatprep.subr.mxu0 0.0
  %111 = vmatpush1.msra.mxu0 %v29
  %112 = vmatprep.subr.mxu0 0.0
  %113 = vmatpush1.msra.mxu0 %v28
  %114 = vmatprep.subr.mxu0 0.0
  %115 = vmatpush2.msra.mxu0 0.0
  %116 = vmatprep.subr.mxu0 0.0
  %117 = vmatpush2.msra.mxu0 0.0
  %118 = vmatprep.subr.mxu0 0.0
  %119 = vmatpush2.msra.mxu0 0.0
  %120 = vmatprep.subr.mxu0 0.0
  %121 = vmatpush2.msra.mxu0 0.0
  %122 = vmatprep.subr.mxu0 0.0
  %123 = vmatpush2.msra.mxu0 0.0
  %124 = vmatprep.subr.mxu0 0.0
  %125 = vmatpush2.msra.mxu0 0.0
  %126 = vmatprep.subr.mxu0 0.0
  %127 = vmatpush2.msra.mxu0 0.0
  %128 = vmatprep.subr.mxu0 0.0
  %129 = vmatpush2.msra.mxu0 0.0
  %130 = vmatprep.subr.mxu0 0.0
  %131 = vmatpush2.msra.mxu0 0.0
  %132 = vmatprep.subr.mxu0 0.0
  %133 = vmatpush2.msra.mxu0 0.0
  %134 = vmatprep.subr.mxu0 0.0
  %135 = vmatpush2.msra.mxu0 0.0
  %136 = vmatprep.subr.mxu0 0.0
  %137 = vmatpush2.msra.mxu0 0.0
  %138 = vmatprep.subr.mxu0 0.0
  %139 = vmatpush2.msra.mxu0 0.0
  %140 = vmatprep.subr.mxu0 0.0
  %141 = vmatpush2.msra.mxu0 0.0
  %142 = vmatprep.subr.mxu0 0.0
  %143 = vmatpush2.msra.mxu0 0.0
  %144 = vmatprep.subr.mxu0 0.0
  %145 = vmatpush2.msra.mxu0 0.0
  %146 = vmatprep.mubr.f32.mxu0 0.0
  %147 = vmatmul.mubr.f32.gmra.mxu0 %v77
  %v148 = vpop.f32.mrf.mxu0
  %v149 = vadd.f32 %v74, %v148
  %v150 = vpop.f32.mrf.mxu0
  %151 = vmatprep.mubr.f32.mxu0 0.0
  %152 = vmatmul.mubr.f32.gmra.mxu0 %v80
  %v153 = vpop.f32.mrf.mxu0
  %v154 = vadd.f32 %v74, %v153
  %v155 = vpop.f32.mrf.mxu0
  %156 = vdwg.mxu0
  %v157 = vmul.f32 %v149, 0.35355338
  %v158 = vmul.f32 %v154, 0.35355338
  %v159 = vmul.f32 %v25, %v25
  %v160 = vmul.f32 %v26, %v26
  %vm161 = vcmask 64512
  %v162 = vsel %vm161, %v159, 0.0
  %163 = vadd.xlane.f32.xlu0 %v162
  %v164 = vpop.xlane.xlu0 %163
  %v165 = vsel %vm161, %v160, 0.0
  %166 = vadd.xlane.f32.xlu0 %v165
  %v167 = vpop.xlane.xlu0 %166
  %v169 = vsel %vm161, %v25, 0
  %171 = vmatprep.subr.mxu0 0.0
  %172 = vmatpush1.xpose.msra.mxu0 0.0
  %173 = vmatprep.subr.mxu0 0.0
  %174 = vmatpush1.xpose.msra.mxu0 0.0
  %175 = vmatprep.subr.mxu0 0.0
  %176 = vmatpush1.xpose.msra.mxu0 0.0
  %177 = vmatprep.subr.mxu0 0.0
  %178 = vmatpush1.xpose.msra.mxu0 0.0
  %179 = vmatprep.subr.mxu0 0.0
  %180 = vmatpush1.xpose.msra.mxu0 0.0
  %181 = vmatprep.subr.mxu0 0.0
  %182 = vmatpush1.xpose.msra.mxu0 0.0
  %183 = vmatprep.subr.mxu0 0.0
  %184 = vmatpush1.xpose.msra.mxu0 0.0
  %185 = vmatprep.subr.mxu0 0.0
  %186 = vmatpush1.xpose.msra.mxu0 0.0
  %187 = vmatprep.subr.mxu0 0.0
  %188 = vmatpush1.xpose.msra.mxu0 0.0
  %189 = vmatprep.subr.mxu0 0.0
  %190 = vmatpush1.xpose.msra.mxu0 0.0
  %191 = vmatprep.subr.mxu0 0.0
  %192 = vmatpush1.xpose.msra.mxu0 0.0
  %193 = vmatprep.subr.mxu0 0.0
  %194 = vmatpush1.xpose.msra.mxu0 0.0
  %195 = vmatprep.subr.mxu0 0.0
  %196 = vmatpush1.xpose.msra.mxu0 0.0
  %197 = vmatprep.subr.mxu0 0.0
  %198 = vmatpush1.xpose.msra.mxu0 0.0
  %199 = vmatprep.subr.mxu0 0.0
  %200 = vmatpush1.xpose.msra.mxu0 0.0
  %201 = vmatprep.subr.mxu0 0.0
  %202 = vmatpush1.xpose.msra.mxu0 %v169
  %203 = vmatprep.subr.mxu0 0.0
  %204 = vmatpush2.xpose.msra.mxu0 0.0
  %205 = vmatprep.subr.mxu0 0.0
  %206 = vmatpush2.xpose.msra.mxu0 0.0
  %207 = vmatprep.subr.mxu0 0.0
  %208 = vmatpush2.xpose.msra.mxu0 0.0
  %209 = vmatprep.subr.mxu0 0.0
  %210 = vmatpush2.xpose.msra.mxu0 0.0
  %211 = vmatprep.subr.mxu0 0.0
  %212 = vmatpush2.xpose.msra.mxu0 0.0
  %213 = vmatprep.subr.mxu0 0.0
  %214 = vmatpush2.xpose.msra.mxu0 0.0
  %215 = vmatprep.subr.mxu0 0.0
  %216 = vmatpush2.xpose.msra.mxu0 0.0
  %217 = vmatprep.subr.mxu0 0.0
  %218 = vmatpush2.xpose.msra.mxu0 0.0
  %219 = vmatprep.subr.mxu0 0.0
  %220 = vmatpush2.xpose.msra.mxu0 0.0
  %221 = vmatprep.subr.mxu0 0.0
  %222 = vmatpush2.xpose.msra.mxu0 0.0
  %223 = vmatprep.subr.mxu0 0.0
  %224 = vmatpush2.xpose.msra.mxu0 0.0
  %225 = vmatprep.subr.mxu0 0.0
  %226 = vmatpush2.xpose.msra.mxu0 0.0
  %227 = vmatprep.subr.mxu0 0.0
  %228 = vmatpush2.xpose.msra.mxu0 0.0
  %229 = vmatprep.subr.mxu0 0.0
  %230 = vmatpush2.xpose.msra.mxu0 0.0
  %231 = vmatprep.subr.mxu0 0.0
  %232 = vmatpush2.xpose.msra.mxu0 0.0
  %233 = vmatprep.subr.mxu0 0.0
  %234 = vmatpush2.xpose.msra.mxu0 0.0
  %235 = vmatprep.mubr.f32.mxu0 0.0
  %236 = vmatmul.mubr.f32.gmra.mxu0 %v169
  %v237 = vpop.f32.mrf.mxu0
  %v238 = vadd.f32 0.0, %v237
  %v239 = vpop.f32.mrf.mxu0
  %240 = vdwg.mxu0
  %v242 = vsel %vm161, %v26, 0
  %244 = vmatprep.subr.mxu0 0.0
  %245 = vmatpush1.xpose.msra.mxu0 0.0
  %246 = vmatprep.subr.mxu0 0.0
  %247 = vmatpush1.xpose.msra.mxu0 0.0
  %248 = vmatprep.subr.mxu0 0.0
  %249 = vmatpush1.xpose.msra.mxu0 0.0
  %250 = vmatprep.subr.mxu0 0.0
  %251 = vmatpush1.xpose.msra.mxu0 0.0
  %252 = vmatprep.subr.mxu0 0.0
  %253 = vmatpush1.xpose.msra.mxu0 0.0
  %254 = vmatprep.subr.mxu0 0.0
  %255 = vmatpush1.xpose.msra.mxu0 0.0
  %256 = vmatprep.subr.mxu0 0.0
  %257 = vmatpush1.xpose.msra.mxu0 0.0
  %258 = vmatprep.subr.mxu0 0.0
  %259 = vmatpush1.xpose.msra.mxu0 0.0
  %260 = vmatprep.subr.mxu0 0.0
  %261 = vmatpush1.xpose.msra.mxu0 0.0
  %262 = vmatprep.subr.mxu0 0.0
  %263 = vmatpush1.xpose.msra.mxu0 0.0
  %264 = vmatprep.subr.mxu0 0.0
  %265 = vmatpush1.xpose.msra.mxu0 0.0
  %266 = vmatprep.subr.mxu0 0.0
  %267 = vmatpush1.xpose.msra.mxu0 0.0
  %268 = vmatprep.subr.mxu0 0.0
  %269 = vmatpush1.xpose.msra.mxu0 0.0
  %270 = vmatprep.subr.mxu0 0.0
  %271 = vmatpush1.xpose.msra.mxu0 0.0
  %272 = vmatprep.subr.mxu0 0.0
  %273 = vmatpush1.xpose.msra.mxu0 0.0
  %274 = vmatprep.subr.mxu0 0.0
  %275 = vmatpush1.xpose.msra.mxu0 %v242
  %276 = vmatprep.subr.mxu0 0.0
  %277 = vmatpush2.xpose.msra.mxu0 0.0
  %278 = vmatprep.subr.mxu0 0.0
  %279 = vmatpush2.xpose.msra.mxu0 0.0
  %280 = vmatprep.subr.mxu0 0.0
  %281 = vmatpush2.xpose.msra.mxu0 0.0
  %282 = vmatprep.subr.mxu0 0.0
  %283 = vmatpush2.xpose.msra.mxu0 0.0
  %284 = vmatprep.subr.mxu0 0.0
  %285 = vmatpush2.xpose.msra.mxu0 0.0
  %286 = vmatprep.subr.mxu0 0.0
  %287 = vmatpush2.xpose.msra.mxu0 0.0
  %288 = vmatprep.subr.mxu0 0.0
  %289 = vmatpush2.xpose.msra.mxu0 0.0
  %290 = vmatprep.subr.mxu0 0.0
  %291 = vmatpush2.xpose.msra.mxu0 0.0
  %292 = vmatprep.subr.mxu0 0.0
  %293 = vmatpush2.xpose.msra.mxu0 0.0
  %294 = vmatprep.subr.mxu0 0.0
  %295 = vmatpush2.xpose.msra.mxu0 0.0
  %296 = vmatprep.subr.mxu0 0.0
  %297 = vmatpush2.xpose.msra.mxu0 0.0
  %298 = vmatprep.subr.mxu0 0.0
  %299 = vmatpush2.xpose.msra.mxu0 0.0
  %300 = vmatprep.subr.mxu0 0.0
  %301 = vmatpush2.xpose.msra.mxu0 0.0
  %302 = vmatprep.subr.mxu0 0.0
  %303 = vmatpush2.xpose.msra.mxu0 0.0
  %304 = vmatprep.subr.mxu0 0.0
  %305 = vmatpush2.xpose.msra.mxu0 0.0
  %306 = vmatprep.subr.mxu0 0.0
  %307 = vmatpush2.xpose.msra.mxu0 0.0
  %308 = vmatprep.mubr.f32.mxu0 0.0
  %309 = vmatmul.mubr.f32.gmra.mxu0 %v242
  %v310 = vpop.f32.mrf.mxu0
  %v311 = vadd.f32 0.0, %v310
  %v312 = vpop.f32.mrf.mxu0
  %313 = vdwg.mxu0
  %v316 = vlaneseq
  %v317 = vand.u32 %v316, 127
  %v318 = vlaneseq
  %v319 = vshrl.u32 %v318, 7
  %v320 = vsub.s32 %v317, %v319
  %v321 = vrot.slane %v164, %v320
  %v322 = vlaneseq
  %v323 = vshrl.u32 %v322, 7
  %v324 = vsub.s32 %v317, %v323
  %v325 = vrot.slane %v167, %v324
  %vm326 = vcmask 1041409
  %vm327 = vcmask 1042434
  %v328 = vsel %vm327, %v321, %v321
  %vm329 = vcmask 1043459
  %v330 = vsel %vm329, %v321, %v328
  %vm331 = vcmask 1044484
  %v332 = vsel %vm331, %v321, %v330
  %vm333 = vcmask 1045509
  %v334 = vsel %vm333, %v321, %v332
  %vm335 = vcmask 1046534
  %v336 = vsel %vm335, %v321, %v334
  %vm337 = vcmask 1047559
  %v338 = vsel %vm337, %v321, %v336
  %v339 = vsel %vm327, %v325, %v325
  %v340 = vsel %vm329, %v325, %v339
  %v341 = vsel %vm331, %v325, %v340
  %v342 = vsel %vm333, %v325, %v341
  %v343 = vsel %vm335, %v325, %v342
  %v344 = vsel %vm337, %v325, %v343
  %v347 = vadd.f32 %v164, %v338
  %v348 = vadd.f32 %v167, %v344
  %v349 = vmul.f32 %v238, 2.0
  %v350 = vmul.f32 %v311, 2.0
  %v351 = vsub.f32 %v347, %v349
  %v352 = vsub.f32 %v348, %v350
  %v353 = vlaneseq
  %v354 = vshrl.u32 %v353, 7
  %vm355 = vcmp.ne.s32.totalorder %v354, %v317
  %v356 = vsel %vm355, 1, 0
  %v357 = vcvt.s32.f32 %v356
  %v358 = vmax.f32 %v351, 0.0
  %v359 = vmax.f32 %v352, 0.0
  %v360 = vmul.f32 %v358, %v357
  %v361 = vmul.f32 %v359, %v357
  %v362 = vrsqrt.pop %v360
  %v363 = vmul.f32 %v360, %v362
  %vm364 = vcmp.eq.f32.partialorder %v360, inf
  %v365 = vsel %vm364, %v360, %v363
  %vm366 = vcmp.eq.f32.partialorder %v360, 0.0
  %v367 = vand.u32 %v360, 2147483648
  %v368 = vsel %vm366, %v367, %v365
  %v369 = vrsqrt.pop %v361
  %v370 = vmul.f32 %v361, %v369
  %vm371 = vcmp.eq.f32.partialorder %v361, inf
  %v372 = vsel %vm371, %v361, %v370
  %vm373 = vcmp.eq.f32.partialorder %v361, 0.0
  %v374 = vand.u32 %v361, 2147483648
  %v375 = vsel %vm373, %v374, %v372
  %v376 = vmul.f32 %v360, -0.5
  %v377 = vmul.f32 %v361, -0.5
  %v378 = vmul.f32 %v376, 1.442695
  %v379 = vpow.pop %v378
  %v380 = vmul.f32 %v377, 1.442695
  %v381 = vpow.pop %v380
  %v382 = vlaneseq
  %v383 = vshrl.u32 %v382, 7
  %v384 = vsub.s32 0, %v383
  %v385 = vrot.slane %v368, %v384
  %387 = vbcast.lane.b32.xlu0 %v385, 256
  %v388 = vpop.permute.xlu0 %387
  %v389 = vlaneseq
  %v390 = vshrl.u32 %v389, 7
  %v391 = vsub.s32 1, %v390
  %v392 = vrot.slane %v368, %v391
  %394 = vbcast.lane.b32.xlu0 %v392, 256
  %v395 = vpop.permute.xlu0 %394
  %v396 = vlaneseq
  %v397 = vshrl.u32 %v396, 7
  %v398 = vsub.s32 2, %v397
  %v399 = vrot.slane %v368, %v398
  %401 = vbcast.lane.b32.xlu0 %v399, 256
  %v402 = vpop.permute.xlu0 %401
  %v403 = vlaneseq
  %v404 = vshrl.u32 %v403, 7
  %v405 = vsub.s32 3, %v404
  %v406 = vrot.slane %v368, %v405
  %408 = vbcast.lane.b32.xlu0 %v406, 256
  %v409 = vpop.permute.xlu0 %408
  %v410 = vlaneseq
  %v411 = vshrl.u32 %v410, 7
  %v412 = vsub.s32 4, %v411
  %v413 = vrot.slane %v368, %v412
  %415 = vbcast.lane.b32.xlu0 %v413, 256
  %v416 = vpop.permute.xlu0 %415
  %v417 = vlaneseq
  %v418 = vshrl.u32 %v417, 7
  %v419 = vsub.s32 5, %v418
  %v420 = vrot.slane %v368, %v419
  %422 = vbcast.lane.b32.xlu0 %v420, 256
  %v423 = vpop.permute.xlu0 %422
  %v424 = vlaneseq
  %v425 = vshrl.u32 %v424, 7
  %v426 = vsub.s32 6, %v425
  %v427 = vrot.slane %v368, %v426
  %429 = vbcast.lane.b32.xlu0 %v427, 256
  %v430 = vpop.permute.xlu0 %429
  %v431 = vlaneseq
  %v432 = vshrl.u32 %v431, 7
  %v433 = vsub.s32 7, %v432
  %v434 = vrot.slane %v368, %v433
  %436 = vbcast.lane.b32.xlu0 %v434, 256
  %v437 = vpop.permute.xlu0 %436
  %v438 = vlaneseq
  %v439 = vshrl.u32 %v438, 7
  %v440 = vsub.s32 0, %v439
  %v441 = vrot.slane %v375, %v440
  %443 = vbcast.lane.b32.xlu0 %v441, 256
  %v444 = vpop.permute.xlu0 %443
  %v445 = vlaneseq
  %v446 = vshrl.u32 %v445, 7
  %v447 = vsub.s32 1, %v446
  %v448 = vrot.slane %v375, %v447
  %450 = vbcast.lane.b32.xlu0 %v448, 256
  %v451 = vpop.permute.xlu0 %450
  %v452 = vlaneseq
  %v453 = vshrl.u32 %v452, 7
  %v454 = vsub.s32 2, %v453
  %v455 = vrot.slane %v375, %v454
  %457 = vbcast.lane.b32.xlu0 %v455, 256
  %v458 = vpop.permute.xlu0 %457
  %v459 = vlaneseq
  %v460 = vshrl.u32 %v459, 7
  %v461 = vsub.s32 3, %v460
  %v462 = vrot.slane %v375, %v461
  %464 = vbcast.lane.b32.xlu0 %v462, 256
  %v465 = vpop.permute.xlu0 %464
  %v466 = vlaneseq
  %v467 = vshrl.u32 %v466, 7
  %v468 = vsub.s32 4, %v467
  %v469 = vrot.slane %v375, %v468
  %471 = vbcast.lane.b32.xlu0 %v469, 256
  %v472 = vpop.permute.xlu0 %471
  %v473 = vlaneseq
  %v474 = vshrl.u32 %v473, 7
  %v475 = vsub.s32 5, %v474
  %v476 = vrot.slane %v375, %v475
  %478 = vbcast.lane.b32.xlu0 %v476, 256
  %v479 = vpop.permute.xlu0 %478
  %v480 = vlaneseq
  %v481 = vshrl.u32 %v480, 7
  %v482 = vsub.s32 6, %v481
  %v483 = vrot.slane %v375, %v482
  %485 = vbcast.lane.b32.xlu0 %v483, 256
  %v486 = vpop.permute.xlu0 %485
  %v487 = vlaneseq
  %v488 = vshrl.u32 %v487, 7
  %v489 = vsub.s32 7, %v488
  %v490 = vrot.slane %v375, %v489
  %492 = vbcast.lane.b32.xlu0 %v490, 256
  %v493 = vpop.permute.xlu0 %492
  %v494 = vlaneseq
  %v495 = vshrl.u32 %v494, 7
  %v496 = vsub.s32 0, %v495
  %v497 = vrot.slane %v61, %v496
  %v498 = vmul.f32 %v388, %v497
  %v499 = vmul.f32 %v395, %v497
  %v500 = vmul.f32 %v402, %v497
  %v501 = vmul.f32 %v409, %v497
  %v502 = vmul.f32 %v416, %v497
  %v503 = vmul.f32 %v423, %v497
  %v504 = vmul.f32 %v430, %v497
  %v505 = vmul.f32 %v437, %v497
  %v506 = vmul.f32 %v444, %v497
  %v507 = vmul.f32 %v451, %v497
  %v508 = vmul.f32 %v458, %v497
  %v509 = vmul.f32 %v465, %v497
  %v510 = vmul.f32 %v472, %v497
  %v511 = vmul.f32 %v479, %v497
  %v512 = vmul.f32 %v486, %v497
  %v513 = vmul.f32 %v493, %v497
  %v514 = vlaneseq
  %v515 = vshrl.u32 %v514, 7
  %v516 = vsub.s32 0, %v515
  %v517 = vrot.slane %v62, %v516
  %v518 = vadd.f32 %v498, %v517
  %v519 = vadd.f32 %v499, %v517
  %v520 = vadd.f32 %v500, %v517
  %v521 = vadd.f32 %v501, %v517
  %v522 = vadd.f32 %v502, %v517
  %v523 = vadd.f32 %v503, %v517
  %v524 = vadd.f32 %v504, %v517
  %v525 = vadd.f32 %v505, %v517
  %v526 = vadd.f32 %v506, %v517
  %v527 = vadd.f32 %v507, %v517
  %v528 = vadd.f32 %v508, %v517
  %v529 = vadd.f32 %v509, %v517
  %v530 = vadd.f32 %v510, %v517
  %v531 = vadd.f32 %v511, %v517
  %v532 = vadd.f32 %v512, %v517
  %v533 = vadd.f32 %v513, %v517
  %v534 = vmax.f32 %v518, 0.0
  %v535 = vmax.f32 %v519, 0.0
  %v536 = vmax.f32 %v520, 0.0
  %v537 = vmax.f32 %v521, 0.0
  %v538 = vmax.f32 %v522, 0.0
  %v539 = vmax.f32 %v523, 0.0
  %v540 = vmax.f32 %v524, 0.0
  %v541 = vmax.f32 %v525, 0.0
  %v542 = vmax.f32 %v526, 0.0
  %v543 = vmax.f32 %v527, 0.0
  %v544 = vmax.f32 %v528, 0.0
  %v545 = vmax.f32 %v529, 0.0
  %v546 = vmax.f32 %v530, 0.0
  %v547 = vmax.f32 %v531, 0.0
  %v548 = vmax.f32 %v532, 0.0
  %v549 = vmax.f32 %v533, 0.0
  %v550 = vlaneseq
  %v551 = vshrl.u32 %v550, 7
  %v552 = vsub.s32 0, %v551
  %v553 = vrot.slane %v63, %v552
  %554 = vmatprep.subr.mxu0 0.0
  %555 = vmatpush1.msra.mxu0 %v51
  %556 = vmatprep.subr.mxu0 0.0
  %557 = vmatpush1.msra.mxu0 %v50
  %558 = vmatprep.subr.mxu0 0.0
  %559 = vmatpush1.msra.mxu0 %v49
  %560 = vmatprep.subr.mxu0 0.0
  %561 = vmatpush1.msra.mxu0 %v48
  %562 = vmatprep.subr.mxu0 0.0
  %563 = vmatpush1.msra.mxu0 %v47
  %564 = vmatprep.subr.mxu0 0.0
  %565 = vmatpush1.msra.mxu0 %v46
  %566 = vmatprep.subr.mxu0 0.0
  %567 = vmatpush1.msra.mxu0 %v45
  %568 = vmatprep.subr.mxu0 0.0
  %569 = vmatpush1.msra.mxu0 %v44
  %570 = vmatprep.subr.mxu0 0.0
  %571 = vmatpush1.msra.mxu0 %v43
  %572 = vmatprep.subr.mxu0 0.0
  %573 = vmatpush1.msra.mxu0 %v42
  %574 = vmatprep.subr.mxu0 0.0
  %575 = vmatpush1.msra.mxu0 %v41
  %576 = vmatprep.subr.mxu0 0.0
  %577 = vmatpush1.msra.mxu0 %v40
  %578 = vmatprep.subr.mxu0 0.0
  %579 = vmatpush1.msra.mxu0 %v39
  %580 = vmatprep.subr.mxu0 0.0
  %581 = vmatpush1.msra.mxu0 %v38
  %582 = vmatprep.subr.mxu0 0.0
  %583 = vmatpush1.msra.mxu0 %v37
  %584 = vmatprep.subr.mxu0 0.0
  %585 = vmatpush1.msra.mxu0 %v36
  %586 = vmatprep.subr.mxu0 0.0
  %587 = vmatpush2.msra.mxu0 0.0
  %588 = vmatprep.subr.mxu0 0.0
  %589 = vmatpush2.msra.mxu0 0.0
  %590 = vmatprep.subr.mxu0 0.0
  %591 = vmatpush2.msra.mxu0 0.0
  %592 = vmatprep.subr.mxu0 0.0
  %593 = vmatpush2.msra.mxu0 0.0
  %594 = vmatprep.subr.mxu0 0.0
  %595 = vmatpush2.msra.mxu0 0.0
  %596 = vmatprep.subr.mxu0 0.0
  %597 = vmatpush2.msra.mxu0 0.0
  %598 = vmatprep.subr.mxu0 0.0
  %599 = vmatpush2.msra.mxu0 0.0
  %600 = vmatprep.subr.mxu0 0.0
  %601 = vmatpush2.msra.mxu0 0.0
  %602 = vmatprep.subr.mxu0 0.0
  %603 = vmatpush2.msra.mxu0 0.0
  %604 = vmatprep.subr.mxu0 0.0
  %605 = vmatpush2.msra.mxu0 0.0
  %606 = vmatprep.subr.mxu0 0.0
  %607 = vmatpush2.msra.mxu0 0.0
  %608 = vmatprep.subr.mxu0 0.0
  %609 = vmatpush2.msra.mxu0 0.0
  %610 = vmatprep.subr.mxu0 0.0
  %611 = vmatpush2.msra.mxu0 0.0
  %612 = vmatprep.subr.mxu0 0.0
  %613 = vmatpush2.msra.mxu0 0.0
  %614 = vmatprep.subr.mxu0 0.0
  %615 = vmatpush2.msra.mxu0 0.0
  %616 = vmatprep.subr.mxu0 0.0
  %617 = vmatpush2.msra.mxu0 0.0
  %618 = vmatprep.mubr.f32.mxu0 0.0
  %619 = vmatmul.mubr.f32.gmra.mxu0 %v534
  %v620 = vpop.f32.mrf.mxu0
  %v621 = vadd.f32 %v553, %v620
  %v622 = vpop.f32.mrf.mxu0
  %623 = vmatprep.mubr.f32.mxu0 0.0
  %624 = vmatmul.mubr.f32.gmra.mxu0 %v535
  %v625 = vpop.f32.mrf.mxu0
  %v626 = vadd.f32 %v553, %v625
  %v627 = vpop.f32.mrf.mxu0
  %628 = vmatprep.mubr.f32.mxu0 0.0
  %629 = vmatmul.mubr.f32.gmra.mxu0 %v536
  %v630 = vpop.f32.mrf.mxu0
  %v631 = vadd.f32 %v553, %v630
  %v632 = vpop.f32.mrf.mxu0
  %633 = vmatprep.mubr.f32.mxu0 0.0
  %634 = vmatmul.mubr.f32.gmra.mxu0 %v537
  %v635 = vpop.f32.mrf.mxu0
  %v636 = vadd.f32 %v553, %v635
  %v637 = vpop.f32.mrf.mxu0
  %638 = vmatprep.mubr.f32.mxu0 0.0
  %639 = vmatmul.mubr.f32.gmra.mxu0 %v538
  %v640 = vpop.f32.mrf.mxu0
  %v641 = vadd.f32 %v553, %v640
  %v642 = vpop.f32.mrf.mxu0
  %643 = vmatprep.mubr.f32.mxu0 0.0
  %644 = vmatmul.mubr.f32.gmra.mxu0 %v539
  %v645 = vpop.f32.mrf.mxu0
  %v646 = vadd.f32 %v553, %v645
  %v647 = vpop.f32.mrf.mxu0
  %648 = vmatprep.mubr.f32.mxu0 0.0
  %649 = vmatmul.mubr.f32.gmra.mxu0 %v540
  %v650 = vpop.f32.mrf.mxu0
  %v651 = vadd.f32 %v553, %v650
  %v652 = vpop.f32.mrf.mxu0
  %653 = vmatprep.mubr.f32.mxu0 0.0
  %654 = vmatmul.mubr.f32.gmra.mxu0 %v541
  %v655 = vpop.f32.mrf.mxu0
  %v656 = vadd.f32 %v553, %v655
  %v657 = vpop.f32.mrf.mxu0
  %658 = vmatprep.mubr.f32.mxu0 0.0
  %659 = vmatmul.mubr.f32.gmra.mxu0 %v542
  %v660 = vpop.f32.mrf.mxu0
  %v661 = vadd.f32 %v553, %v660
  %v662 = vpop.f32.mrf.mxu0
  %663 = vmatprep.mubr.f32.mxu0 0.0
  %664 = vmatmul.mubr.f32.gmra.mxu0 %v543
  %v665 = vpop.f32.mrf.mxu0
  %v666 = vadd.f32 %v553, %v665
  %v667 = vpop.f32.mrf.mxu0
  %668 = vmatprep.mubr.f32.mxu0 0.0
  %669 = vmatmul.mubr.f32.gmra.mxu0 %v544
  %v670 = vpop.f32.mrf.mxu0
  %v671 = vadd.f32 %v553, %v670
  %v672 = vpop.f32.mrf.mxu0
  %673 = vmatprep.mubr.f32.mxu0 0.0
  %674 = vmatmul.mubr.f32.gmra.mxu0 %v545
  %v675 = vpop.f32.mrf.mxu0
  %v676 = vadd.f32 %v553, %v675
  %v677 = vpop.f32.mrf.mxu0
  %678 = vmatprep.mubr.f32.mxu0 0.0
  %679 = vmatmul.mubr.f32.gmra.mxu0 %v546
  %v680 = vpop.f32.mrf.mxu0
  %v681 = vadd.f32 %v553, %v680
  %v682 = vpop.f32.mrf.mxu0
  %683 = vmatprep.mubr.f32.mxu0 0.0
  %684 = vmatmul.mubr.f32.gmra.mxu0 %v547
  %v685 = vpop.f32.mrf.mxu0
  %v686 = vadd.f32 %v553, %v685
  %v687 = vpop.f32.mrf.mxu0
  %688 = vmatprep.mubr.f32.mxu0 0.0
  %689 = vmatmul.mubr.f32.gmra.mxu0 %v548
  %v690 = vpop.f32.mrf.mxu0
  %v691 = vadd.f32 %v553, %v690
  %v692 = vpop.f32.mrf.mxu0
  %693 = vmatprep.mubr.f32.mxu0 0.0
  %694 = vmatmul.mubr.f32.gmra.mxu0 %v549
  %v695 = vpop.f32.mrf.mxu0
  %v696 = vadd.f32 %v553, %v695
  %v697 = vpop.f32.mrf.mxu0
  %698 = vdwg.mxu0
  %v699 = vlaneseq
  %v700 = vshrl.u32 %v699, 7
  %v701 = vsub.s32 0, %v700
  %v702 = vrot.slane %v379, %v701
  %704 = vbcast.lane.b32.xlu0 %v702, 256
  %v705 = vpop.permute.xlu0 %704
  %v706 = vlaneseq
  %v707 = vshrl.u32 %v706, 7
  %v708 = vsub.s32 1, %v707
  %v709 = vrot.slane %v379, %v708
  %711 = vbcast.lane.b32.xlu0 %v709, 256
  %v712 = vpop.permute.xlu0 %711
  %v713 = vlaneseq
  %v714 = vshrl.u32 %v713, 7
  %v715 = vsub.s32 2, %v714
  %v716 = vrot.slane %v379, %v715
  %718 = vbcast.lane.b32.xlu0 %v716, 256
  %v719 = vpop.permute.xlu0 %718
  %v720 = vlaneseq
  %v721 = vshrl.u32 %v720, 7
  %v722 = vsub.s32 3, %v721
  %v723 = vrot.slane %v379, %v722
  %725 = vbcast.lane.b32.xlu0 %v723, 256
  %v726 = vpop.permute.xlu0 %725
  %v727 = vlaneseq
  %v728 = vshrl.u32 %v727, 7
  %v729 = vsub.s32 4, %v728
  %v730 = vrot.slane %v379, %v729
  %732 = vbcast.lane.b32.xlu0 %v730, 256
  %v733 = vpop.permute.xlu0 %732
  %v734 = vlaneseq
  %v735 = vshrl.u32 %v734, 7
  %v736 = vsub.s32 5, %v735
  %v737 = vrot.slane %v379, %v736
  %739 = vbcast.lane.b32.xlu0 %v737, 256
  %v740 = vpop.permute.xlu0 %739
  %v741 = vlaneseq
  %v742 = vshrl.u32 %v741, 7
  %v743 = vsub.s32 6, %v742
  %v744 = vrot.slane %v379, %v743
  %746 = vbcast.lane.b32.xlu0 %v744, 256
  %v747 = vpop.permute.xlu0 %746
  %v748 = vlaneseq
  %v749 = vshrl.u32 %v748, 7
  %v750 = vsub.s32 7, %v749
  %v751 = vrot.slane %v379, %v750
  %753 = vbcast.lane.b32.xlu0 %v751, 256
  %v754 = vpop.permute.xlu0 %753
  %v755 = vlaneseq
  %v756 = vshrl.u32 %v755, 7
  %v757 = vsub.s32 0, %v756
  %v758 = vrot.slane %v381, %v757
  %760 = vbcast.lane.b32.xlu0 %v758, 256
  %v761 = vpop.permute.xlu0 %760
  %v762 = vlaneseq
  %v763 = vshrl.u32 %v762, 7
  %v764 = vsub.s32 1, %v763
  %v765 = vrot.slane %v381, %v764
  %767 = vbcast.lane.b32.xlu0 %v765, 256
  %v768 = vpop.permute.xlu0 %767
  %v769 = vlaneseq
  %v770 = vshrl.u32 %v769, 7
  %v771 = vsub.s32 2, %v770
  %v772 = vrot.slane %v381, %v771
  %774 = vbcast.lane.b32.xlu0 %v772, 256
  %v775 = vpop.permute.xlu0 %774
  %v776 = vlaneseq
  %v777 = vshrl.u32 %v776, 7
  %v778 = vsub.s32 3, %v777
  %v779 = vrot.slane %v381, %v778
  %781 = vbcast.lane.b32.xlu0 %v779, 256
  %v782 = vpop.permute.xlu0 %781
  %v783 = vlaneseq
  %v784 = vshrl.u32 %v783, 7
  %v785 = vsub.s32 4, %v784
  %v786 = vrot.slane %v381, %v785
  %788 = vbcast.lane.b32.xlu0 %v786, 256
  %v789 = vpop.permute.xlu0 %788
  %v790 = vlaneseq
  %v791 = vshrl.u32 %v790, 7
  %v792 = vsub.s32 5, %v791
  %v793 = vrot.slane %v381, %v792
  %795 = vbcast.lane.b32.xlu0 %v793, 256
  %v796 = vpop.permute.xlu0 %795
  %v797 = vlaneseq
  %v798 = vshrl.u32 %v797, 7
  %v799 = vsub.s32 6, %v798
  %v800 = vrot.slane %v381, %v799
  %802 = vbcast.lane.b32.xlu0 %v800, 256
  %v803 = vpop.permute.xlu0 %802
  %v804 = vlaneseq
  %v805 = vshrl.u32 %v804, 7
  %v806 = vsub.s32 7, %v805
  %v807 = vrot.slane %v381, %v806
  %809 = vbcast.lane.b32.xlu0 %v807, 256
  %v810 = vpop.permute.xlu0 %809
  %v813 = vcombine.high %v149, %v149
  %v815 = vunpack.c.l.s4 1966171168
  %v816 = vunpack.c.0.s8 %v815
  %v817 = vlaneseq
  %v818 = vshrl.u32 %v817, 7
  %v819 = vsub.s32 %v816, %v818
  %v820 = vrot.slane %v149, %v819
  %v822 = vunpack.c.l.s4 1966171168
  %v823 = vunpack.c.0.s8 %v822
  %v824 = vlaneseq
  %v825 = vshrl.u32 %v824, 7
  %v826 = vsub.s32 %v823, %v825
  %v827 = vrot.slane %v813, %v826
  %v828 = vcombine.high %v820, %v820
  %v829 = vcombine.high %v827, %v827
  %v831 = vunpack.c.l.s4 1966171168
  %v832 = vunpack.c.0.s8 %v831
  %v833 = vlaneseq
  %v834 = vshrl.u32 %v833, 7
  %v835 = vsub.s32 %v832, %v834
  %v836 = vrot.slane %v820, %v835
  %v838 = vunpack.c.l.s4 1966171168
  %v839 = vunpack.c.0.s8 %v838
  %v840 = vlaneseq
  %v841 = vshrl.u32 %v840, 7
  %v842 = vsub.s32 %v839, %v841
  %v843 = vrot.slane %v827, %v842
  %v845 = vunpack.c.l.s4 1966171168
  %v846 = vunpack.c.0.s8 %v845
  %v847 = vlaneseq
  %v848 = vshrl.u32 %v847, 7
  %v849 = vsub.s32 %v846, %v848
  %v850 = vrot.slane %v828, %v849
  %v852 = vunpack.c.l.s4 1966171168
  %v853 = vunpack.c.0.s8 %v852
  %v854 = vlaneseq
  %v855 = vshrl.u32 %v854, 7
  %v856 = vsub.s32 %v853, %v855
  %v857 = vrot.slane %v829, %v856
  %v858 = vcombine.high %v836, %v836
  %v859 = vcombine.high %v843, %v843
  %v860 = vcombine.high %v850, %v850
  %v861 = vcombine.high %v857, %v857
  %v862 = vcombine.high %v154, %v154
  %v864 = vunpack.c.l.s4 1966171168
  %v865 = vunpack.c.0.s8 %v864
  %v866 = vlaneseq
  %v867 = vshrl.u32 %v866, 7
  %v868 = vsub.s32 %v865, %v867
  %v869 = vrot.slane %v154, %v868
  %v871 = vunpack.c.l.s4 1966171168
  %v872 = vunpack.c.0.s8 %v871
  %v873 = vlaneseq
  %v874 = vshrl.u32 %v873, 7
  %v875 = vsub.s32 %v872, %v874
  %v876 = vrot.slane %v862, %v875
  %v877 = vcombine.high %v869, %v869
  %v878 = vcombine.high %v876, %v876
  %v880 = vunpack.c.l.s4 1966171168
  %v881 = vunpack.c.0.s8 %v880
  %v882 = vlaneseq
  %v883 = vshrl.u32 %v882, 7
  %v884 = vsub.s32 %v881, %v883
  %v885 = vrot.slane %v869, %v884
  %v887 = vunpack.c.l.s4 1966171168
  %v888 = vunpack.c.0.s8 %v887
  %v889 = vlaneseq
  %v890 = vshrl.u32 %v889, 7
  %v891 = vsub.s32 %v888, %v890
  %v892 = vrot.slane %v876, %v891
  %v894 = vunpack.c.l.s4 1966171168
  %v895 = vunpack.c.0.s8 %v894
  %v896 = vlaneseq
  %v897 = vshrl.u32 %v896, 7
  %v898 = vsub.s32 %v895, %v897
  %v899 = vrot.slane %v877, %v898
  %v901 = vunpack.c.l.s4 1966171168
  %v902 = vunpack.c.0.s8 %v901
  %v903 = vlaneseq
  %v904 = vshrl.u32 %v903, 7
  %v905 = vsub.s32 %v902, %v904
  %v906 = vrot.slane %v878, %v905
  %v907 = vcombine.high %v885, %v885
  %v908 = vcombine.high %v892, %v892
  %v909 = vcombine.high %v899, %v899
  %v910 = vcombine.high %v906, %v906
  %v911 = vlaneseq
  %v912 = vshrl.u32 %v911, 7
  %v913 = vsub.s32 0, %v912
  %v914 = vrot.slane %v836, %v913
  %v915 = vlaneseq
  %v916 = vshrl.u32 %v915, 7
  %v917 = vsub.s32 0, %v916
  %v918 = vrot.slane %v850, %v917
  %v919 = vlaneseq
  %v920 = vshrl.u32 %v919, 7
  %v921 = vsub.s32 0, %v920
  %v922 = vrot.slane %v858, %v921
  %v923 = vlaneseq
  %v924 = vshrl.u32 %v923, 7
  %v925 = vsub.s32 0, %v924
  %v926 = vrot.slane %v860, %v925
  %v927 = vlaneseq
  %v928 = vshrl.u32 %v927, 7
  %v929 = vsub.s32 0, %v928
  %v930 = vrot.slane %v843, %v929
  %v931 = vlaneseq
  %v932 = vshrl.u32 %v931, 7
  %v933 = vsub.s32 0, %v932
  %v934 = vrot.slane %v857, %v933
  %v935 = vlaneseq
  %v936 = vshrl.u32 %v935, 7
  %v937 = vsub.s32 0, %v936
  %v938 = vrot.slane %v859, %v937
  %v939 = vlaneseq
  %v940 = vshrl.u32 %v939, 7
  %v941 = vsub.s32 0, %v940
  %v942 = vrot.slane %v861, %v941
  %v943 = vlaneseq
  %v944 = vshrl.u32 %v943, 7
  %v945 = vsub.s32 0, %v944
  %v946 = vrot.slane %v885, %v945
  %v947 = vlaneseq
  %v948 = vshrl.u32 %v947, 7
  %v949 = vsub.s32 0, %v948
  %v950 = vrot.slane %v899, %v949
  %v951 = vlaneseq
  %v952 = vshrl.u32 %v951, 7
  %v953 = vsub.s32 0, %v952
  %v954 = vrot.slane %v907, %v953
  %v955 = vlaneseq
  %v956 = vshrl.u32 %v955, 7
  %v957 = vsub.s32 0, %v956
  %v958 = vrot.slane %v909, %v957
  %v959 = vlaneseq
  %v960 = vshrl.u32 %v959, 7
  %v961 = vsub.s32 0, %v960
  %v962 = vrot.slane %v892, %v961
  %v963 = vlaneseq
  %v964 = vshrl.u32 %v963, 7
  %v965 = vsub.s32 0, %v964
  %v966 = vrot.slane %v906, %v965
  %v967 = vlaneseq
  %v968 = vshrl.u32 %v967, 7
  %v969 = vsub.s32 0, %v968
  %v970 = vrot.slane %v908, %v969
  %v971 = vlaneseq
  %v972 = vshrl.u32 %v971, 7
  %v973 = vsub.s32 0, %v972
  %v974 = vrot.slane %v910, %v973
  %1007 = vrot.lane.b32.xlu0 %v621, 32
  %v1008 = vpop.permute.xlu0 %1007
  %1009 = vrot.lane.b32.xlu0 %v626, 32
  %v1010 = vpop.permute.xlu0 %1009
  %1011 = vrot.lane.b32.xlu0 %v631, 32
  %v1012 = vpop.permute.xlu0 %1011
  %1013 = vrot.lane.b32.xlu0 %v636, 32
  %v1014 = vpop.permute.xlu0 %1013
  %1015 = vrot.lane.b32.xlu0 %v641, 32
  %v1016 = vpop.permute.xlu0 %1015
  %1017 = vrot.lane.b32.xlu0 %v646, 32
  %v1018 = vpop.permute.xlu0 %1017
  %1019 = vrot.lane.b32.xlu0 %v651, 32
  %v1020 = vpop.permute.xlu0 %1019
  %1021 = vrot.lane.b32.xlu0 %v656, 32
  %v1022 = vpop.permute.xlu0 %1021
  %1023 = vrot.lane.b32.xlu0 %v661, 32
  %v1024 = vpop.permute.xlu0 %1023
  %1025 = vrot.lane.b32.xlu0 %v666, 32
  %v1026 = vpop.permute.xlu0 %1025
  %1027 = vrot.lane.b32.xlu0 %v671, 32
  %v1028 = vpop.permute.xlu0 %1027
  %1029 = vrot.lane.b32.xlu0 %v676, 32
  %v1030 = vpop.permute.xlu0 %1029
  %1031 = vrot.lane.b32.xlu0 %v681, 32
  %v1032 = vpop.permute.xlu0 %1031
  %1033 = vrot.lane.b32.xlu0 %v686, 32
  %v1034 = vpop.permute.xlu0 %1033
  %1035 = vrot.lane.b32.xlu0 %v691, 32
  %v1036 = vpop.permute.xlu0 %1035
  %1037 = vrot.lane.b32.xlu0 %v696, 32
  %v1038 = vpop.permute.xlu0 %1037
  %v1055 = vadd.f32 %v914, %v1008
  %v1056 = vadd.f32 %v918, %v1010
  %v1057 = vadd.f32 %v922, %v1012
  %v1058 = vadd.f32 %v926, %v1014
  %v1059 = vadd.f32 %v930, %v1016
  %v1060 = vadd.f32 %v934, %v1018
  %v1061 = vadd.f32 %v938, %v1020
  %v1062 = vadd.f32 %v942, %v1022
  %v1063 = vadd.f32 %v946, %v1024
  %v1064 = vadd.f32 %v950, %v1026
  %v1065 = vadd.f32 %v954, %v1028
  %v1066 = vadd.f32 %v958, %v1030
  %v1067 = vadd.f32 %v962, %v1032
  %v1068 = vadd.f32 %v966, %v1034
  %v1069 = vadd.f32 %v970, %v1036
  %v1070 = vadd.f32 %v974, %v1038
  %v1071 = vmul.f32 %v705, %v1055
  %v1072 = vmul.f32 %v712, %v1056
  %v1073 = vmul.f32 %v719, %v1057
  %v1074 = vmul.f32 %v726, %v1058
  %v1075 = vmul.f32 %v733, %v1059
  %v1076 = vmul.f32 %v740, %v1060
  %v1077 = vmul.f32 %v747, %v1061
  %v1078 = vmul.f32 %v754, %v1062
  %v1079 = vmul.f32 %v761, %v1063
  %v1080 = vmul.f32 %v768, %v1064
  %v1081 = vmul.f32 %v775, %v1065
  %v1082 = vmul.f32 %v782, %v1066
  %v1083 = vmul.f32 %v789, %v1067
  %v1084 = vmul.f32 %v796, %v1068
  %v1085 = vmul.f32 %v803, %v1069
  %v1086 = vmul.f32 %v810, %v1070
  %1089 = vrot.lane.b32.xlu0 %v157, 32
  %v1090 = vpop.permute.xlu0 %1089
  %1091 = vrot.lane.b32.xlu0 %v158, 32
  %v1092 = vpop.permute.xlu0 %1091
  %v1095 = vmul.f32 %v1071, %v1090
  %v1096 = vmul.f32 %v1072, %v1090
  %v1097 = vmul.f32 %v1073, %v1090
  %v1098 = vmul.f32 %v1074, %v1090
  %v1099 = vmul.f32 %v1075, %v1090
  %v1100 = vmul.f32 %v1076, %v1090
  %v1101 = vmul.f32 %v1077, %v1090
  %v1102 = vmul.f32 %v1078, %v1090
  %v1103 = vmul.f32 %v1079, %v1092
  %v1104 = vmul.f32 %v1080, %v1092
  %v1105 = vmul.f32 %v1081, %v1092
  %v1106 = vmul.f32 %v1082, %v1092
  %v1107 = vmul.f32 %v1083, %v1092
  %v1108 = vmul.f32 %v1084, %v1092
  %v1109 = vmul.f32 %v1085, %v1092
  %v1110 = vmul.f32 %v1086, %v1092
  %v1111 = vlaneseq
  %v1112 = vshrl.u32 %v1111, 7
  %v1113 = vsub.s32 0, %v1112
  %v1114 = vrot.slane %v27, %v1113
  %1116 = vbcast.lane.b32.xlu0 %v1114, 256
  %v1117 = vpop.permute.xlu0 %1116
  %v1118 = vlaneseq
  %v1119 = vshrl.u32 %v1118, 7
  %v1120 = vsub.s32 1, %v1119
  %v1121 = vrot.slane %v27, %v1120
  %1123 = vbcast.lane.b32.xlu0 %v1121, 256
  %v1124 = vpop.permute.xlu0 %1123
  %v1127 = vunpack.c.l.s4 1966171168
  %v1128 = vunpack.c.0.s8 %v1127
  %v1129 = vlaneseq
  %v1130 = vshrl.u32 %v1129, 7
  %v1131 = vsub.s32 %v1128, %v1130
  %v1132 = vrot.slane %v27, %v1131
  %v1133 = vcombine.high %v1132, %v1132
  %v1135 = vunpack.c.l.s4 1966171168
  %v1136 = vunpack.c.0.s8 %v1135
  %v1137 = vlaneseq
  %v1138 = vshrl.u32 %v1137, 7
  %v1139 = vsub.s32 %v1136, %v1138
  %v1140 = vrot.slane %v1132, %v1139
  %v1142 = vunpack.c.l.s4 1966171168
  %v1143 = vunpack.c.0.s8 %v1142
  %v1144 = vlaneseq
  %v1145 = vshrl.u32 %v1144, 7
  %v1146 = vsub.s32 %v1143, %v1145
  %v1147 = vrot.slane %v1133, %v1146
  %v1148 = vlaneseq
  %v1149 = vshrl.u32 %v1148, 7
  %v1150 = vsub.s32 0, %v1149
  %v1151 = vrot.slane %v1140, %v1150
  %v1152 = vlaneseq
  %v1153 = vshrl.u32 %v1152, 7
  %v1154 = vsub.s32 0, %v1153
  %v1155 = vrot.slane %v1147, %v1154
  %v1158 = vmul.f32 %v1117, %v1151
  %v1159 = vmul.f32 %v1124, %v1155
  %v1160 = vsub.f32 1.0, %v1158
  %v1161 = vsub.f32 1.0, %v1159
  %vm1162 = vcmask 523520
  %v1163 = vsel %vm1162, %v1095, -inf
  %v1164 = vrot.slane %v1163, 4
  %v1165 = vmax.f32 %v1163, %v1164
  %v1166 = vrot.slane %v1165, 2
  %v1167 = vmax.f32 %v1165, %v1166
  %v1168 = vrot.slane %v1167, 1
  %v1169 = vmax.f32 %v1167, %v1168
  %v1170 = vsel %vm1162, %v1096, -inf
  %v1171 = vrot.slane %v1170, 4
  %v1172 = vmax.f32 %v1170, %v1171
  %v1173 = vrot.slane %v1172, 2
  %v1174 = vmax.f32 %v1172, %v1173
  %v1175 = vrot.slane %v1174, 1
  %v1176 = vmax.f32 %v1174, %v1175
  %v1177 = vsel %vm1162, %v1097, -inf
  %v1178 = vrot.slane %v1177, 4
  %v1179 = vmax.f32 %v1177, %v1178
  %v1180 = vrot.slane %v1179, 2
  %v1181 = vmax.f32 %v1179, %v1180
  %v1182 = vrot.slane %v1181, 1
  %v1183 = vmax.f32 %v1181, %v1182
  %v1184 = vsel %vm1162, %v1098, -inf
  %v1185 = vrot.slane %v1184, 4
  %v1186 = vmax.f32 %v1184, %v1185
  %v1187 = vrot.slane %v1186, 2
  %v1188 = vmax.f32 %v1186, %v1187
  %v1189 = vrot.slane %v1188, 1
  %v1190 = vmax.f32 %v1188, %v1189
  %v1191 = vsel %vm1162, %v1099, -inf
  %v1192 = vrot.slane %v1191, 4
  %v1193 = vmax.f32 %v1191, %v1192
  %v1194 = vrot.slane %v1193, 2
  %v1195 = vmax.f32 %v1193, %v1194
  %v1196 = vrot.slane %v1195, 1
  %v1197 = vmax.f32 %v1195, %v1196
  %v1198 = vsel %vm1162, %v1100, -inf
  %v1199 = vrot.slane %v1198, 4
  %v1200 = vmax.f32 %v1198, %v1199
  %v1201 = vrot.slane %v1200, 2
  %v1202 = vmax.f32 %v1200, %v1201
  %v1203 = vrot.slane %v1202, 1
  %v1204 = vmax.f32 %v1202, %v1203
  %v1205 = vsel %vm1162, %v1101, -inf
  %v1206 = vrot.slane %v1205, 4
  %v1207 = vmax.f32 %v1205, %v1206
  %v1208 = vrot.slane %v1207, 2
  %v1209 = vmax.f32 %v1207, %v1208
  %v1210 = vrot.slane %v1209, 1
  %v1211 = vmax.f32 %v1209, %v1210
  %v1212 = vsel %vm1162, %v1102, -inf
  %v1213 = vrot.slane %v1212, 4
  %v1214 = vmax.f32 %v1212, %v1213
  %v1215 = vrot.slane %v1214, 2
  %v1216 = vmax.f32 %v1214, %v1215
  %v1217 = vrot.slane %v1216, 1
  %v1218 = vmax.f32 %v1216, %v1217
  %v1219 = vsel %vm1162, %v1103, -inf
  %v1220 = vrot.slane %v1219, 4
  %v1221 = vmax.f32 %v1219, %v1220
  %v1222 = vrot.slane %v1221, 2
  %v1223 = vmax.f32 %v1221, %v1222
  %v1224 = vrot.slane %v1223, 1
  %v1225 = vmax.f32 %v1223, %v1224
  %v1226 = vsel %vm1162, %v1104, -inf
  %v1227 = vrot.slane %v1226, 4
  %v1228 = vmax.f32 %v1226, %v1227
  %v1229 = vrot.slane %v1228, 2
  %v1230 = vmax.f32 %v1228, %v1229
  %v1231 = vrot.slane %v1230, 1
  %v1232 = vmax.f32 %v1230, %v1231
  %v1233 = vsel %vm1162, %v1105, -inf
  %v1234 = vrot.slane %v1233, 4
  %v1235 = vmax.f32 %v1233, %v1234
  %v1236 = vrot.slane %v1235, 2
  %v1237 = vmax.f32 %v1235, %v1236
  %v1238 = vrot.slane %v1237, 1
  %v1239 = vmax.f32 %v1237, %v1238
  %v1240 = vsel %vm1162, %v1106, -inf
  %v1241 = vrot.slane %v1240, 4
  %v1242 = vmax.f32 %v1240, %v1241
  %v1243 = vrot.slane %v1242, 2
  %v1244 = vmax.f32 %v1242, %v1243
  %v1245 = vrot.slane %v1244, 1
  %v1246 = vmax.f32 %v1244, %v1245
  %v1247 = vsel %vm1162, %v1107, -inf
  %v1248 = vrot.slane %v1247, 4
  %v1249 = vmax.f32 %v1247, %v1248
  %v1250 = vrot.slane %v1249, 2
  %v1251 = vmax.f32 %v1249, %v1250
  %v1252 = vrot.slane %v1251, 1
  %v1253 = vmax.f32 %v1251, %v1252
  %v1254 = vsel %vm1162, %v1108, -inf
  %v1255 = vrot.slane %v1254, 4
  %v1256 = vmax.f32 %v1254, %v1255
  %v1257 = vrot.slane %v1256, 2
  %v1258 = vmax.f32 %v1256, %v1257
  %v1259 = vrot.slane %v1258, 1
  %v1260 = vmax.f32 %v1258, %v1259
  %v1261 = vsel %vm1162, %v1109, -inf
  %v1262 = vrot.slane %v1261, 4
  %v1263 = vmax.f32 %v1261, %v1262
  %v1264 = vrot.slane %v1263, 2
  %v1265 = vmax.f32 %v1263, %v1264
  %v1266 = vrot.slane %v1265, 1
  %v1267 = vmax.f32 %v1265, %v1266
  %v1268 = vsel %vm1162, %v1110, -inf
  %v1269 = vrot.slane %v1268, 4
  %v1270 = vmax.f32 %v1268, %v1269
  %v1271 = vrot.slane %v1270, 2
  %v1272 = vmax.f32 %v1270, %v1271
  %v1273 = vrot.slane %v1272, 1
  %v1274 = vmax.f32 %v1272, %v1273
  %v1275 = vsub.f32 %v1095, %v1169
  %v1276 = vsub.f32 %v1096, %v1176
  %v1277 = vsub.f32 %v1097, %v1183
  %v1278 = vsub.f32 %v1098, %v1190
  %v1279 = vsub.f32 %v1099, %v1197
  %v1280 = vsub.f32 %v1100, %v1204
  %v1281 = vsub.f32 %v1101, %v1211
  %v1282 = vsub.f32 %v1102, %v1218
  %v1283 = vsub.f32 %v1103, %v1225
  %v1284 = vsub.f32 %v1104, %v1232
  %v1285 = vsub.f32 %v1105, %v1239
  %v1286 = vsub.f32 %v1106, %v1246
  %v1287 = vsub.f32 %v1107, %v1253
  %v1288 = vsub.f32 %v1108, %v1260
  %v1289 = vsub.f32 %v1109, %v1267
  %v1290 = vsub.f32 %v1110, %v1274
  %v1291 = vmul.f32 %v1275, 1.442695
  %v1292 = vpow.pop %v1291
  %v1293 = vmul.f32 %v1276, 1.442695
  %v1294 = vpow.pop %v1293
  %v1295 = vmul.f32 %v1277, 1.442695
  %v1296 = vpow.pop %v1295
  %v1297 = vmul.f32 %v1278, 1.442695
  %v1298 = vpow.pop %v1297
  %v1299 = vmul.f32 %v1279, 1.442695
  %v1300 = vpow.pop %v1299
  %v1301 = vmul.f32 %v1280, 1.442695
  %v1302 = vpow.pop %v1301
  %v1303 = vmul.f32 %v1281, 1.442695
  %v1304 = vpow.pop %v1303
  %v1305 = vmul.f32 %v1282, 1.442695
  %v1306 = vpow.pop %v1305
  %v1307 = vmul.f32 %v1283, 1.442695
  %v1308 = vpow.pop %v1307
  %v1309 = vmul.f32 %v1284, 1.442695
  %v1310 = vpow.pop %v1309
  %v1311 = vmul.f32 %v1285, 1.442695
  %v1312 = vpow.pop %v1311
  %v1313 = vmul.f32 %v1286, 1.442695
  %v1314 = vpow.pop %v1313
  %v1315 = vmul.f32 %v1287, 1.442695
  %v1316 = vpow.pop %v1315
  %v1317 = vmul.f32 %v1288, 1.442695
  %v1318 = vpow.pop %v1317
  %v1319 = vmul.f32 %v1289, 1.442695
  %v1320 = vpow.pop %v1319
  %v1321 = vmul.f32 %v1290, 1.442695
  %v1322 = vpow.pop %v1321
  %v1323 = vlaneseq
  %v1324 = vshrl.u32 %v1323, 7
  %v1325 = vsub.s32 0, %v1324
  %v1326 = vrot.slane %v1160, %v1325
  %1328 = vbcast.lane.b32.xlu0 %v1326, 256
  %v1329 = vpop.permute.xlu0 %1328
  %v1330 = vlaneseq
  %v1331 = vshrl.u32 %v1330, 7
  %v1332 = vsub.s32 1, %v1331
  %v1333 = vrot.slane %v1160, %v1332
  %1335 = vbcast.lane.b32.xlu0 %v1333, 256
  %v1336 = vpop.permute.xlu0 %1335
  %v1337 = vlaneseq
  %v1338 = vshrl.u32 %v1337, 7
  %v1339 = vsub.s32 2, %v1338
  %v1340 = vrot.slane %v1160, %v1339
  %1342 = vbcast.lane.b32.xlu0 %v1340, 256
  %v1343 = vpop.permute.xlu0 %1342
  %v1344 = vlaneseq
  %v1345 = vshrl.u32 %v1344, 7
  %v1346 = vsub.s32 3, %v1345
  %v1347 = vrot.slane %v1160, %v1346
  %1349 = vbcast.lane.b32.xlu0 %v1347, 256
  %v1350 = vpop.permute.xlu0 %1349
  %v1351 = vlaneseq
  %v1352 = vshrl.u32 %v1351, 7
  %v1353 = vsub.s32 4, %v1352
  %v1354 = vrot.slane %v1160, %v1353
  %1356 = vbcast.lane.b32.xlu0 %v1354, 256
  %v1357 = vpop.permute.xlu0 %1356
  %v1358 = vlaneseq
  %v1359 = vshrl.u32 %v1358, 7
  %v1360 = vsub.s32 5, %v1359
  %v1361 = vrot.slane %v1160, %v1360
  %1363 = vbcast.lane.b32.xlu0 %v1361, 256
  %v1364 = vpop.permute.xlu0 %1363
  %v1365 = vlaneseq
  %v1366 = vshrl.u32 %v1365, 7
  %v1367 = vsub.s32 6, %v1366
  %v1368 = vrot.slane %v1160, %v1367
  %1370 = vbcast.lane.b32.xlu0 %v1368, 256
  %v1371 = vpop.permute.xlu0 %1370
  %v1372 = vlaneseq
  %v1373 = vshrl.u32 %v1372, 7
  %v1374 = vsub.s32 7, %v1373
  %v1375 = vrot.slane %v1160, %v1374
  %1377 = vbcast.lane.b32.xlu0 %v1375, 256
  %v1378 = vpop.permute.xlu0 %1377
  %v1379 = vlaneseq
  %v1380 = vshrl.u32 %v1379, 7
  %v1381 = vsub.s32 0, %v1380
  %v1382 = vrot.slane %v1161, %v1381
  %1384 = vbcast.lane.b32.xlu0 %v1382, 256
  %v1385 = vpop.permute.xlu0 %1384
  %v1386 = vlaneseq
  %v1387 = vshrl.u32 %v1386, 7
  %v1388 = vsub.s32 1, %v1387
  %v1389 = vrot.slane %v1161, %v1388
  %1391 = vbcast.lane.b32.xlu0 %v1389, 256
  %v1392 = vpop.permute.xlu0 %1391
  %v1393 = vlaneseq
  %v1394 = vshrl.u32 %v1393, 7
  %v1395 = vsub.s32 2, %v1394
  %v1396 = vrot.slane %v1161, %v1395
  %1398 = vbcast.lane.b32.xlu0 %v1396, 256
  %v1399 = vpop.permute.xlu0 %1398
  %v1400 = vlaneseq
  %v1401 = vshrl.u32 %v1400, 7
  %v1402 = vsub.s32 3, %v1401
  %v1403 = vrot.slane %v1161, %v1402
  %1405 = vbcast.lane.b32.xlu0 %v1403, 256
  %v1406 = vpop.permute.xlu0 %1405
  %v1407 = vlaneseq
  %v1408 = vshrl.u32 %v1407, 7
  %v1409 = vsub.s32 4, %v1408
  %v1410 = vrot.slane %v1161, %v1409
  %1412 = vbcast.lane.b32.xlu0 %v1410, 256
  %v1413 = vpop.permute.xlu0 %1412
  %v1414 = vlaneseq
  %v1415 = vshrl.u32 %v1414, 7
  %v1416 = vsub.s32 5, %v1415
  %v1417 = vrot.slane %v1161, %v1416
  %1419 = vbcast.lane.b32.xlu0 %v1417, 256
  %v1420 = vpop.permute.xlu0 %1419
  %v1421 = vlaneseq
  %v1422 = vshrl.u32 %v1421, 7
  %v1423 = vsub.s32 6, %v1422
  %v1424 = vrot.slane %v1161, %v1423
  %1426 = vbcast.lane.b32.xlu0 %v1424, 256
  %v1427 = vpop.permute.xlu0 %1426
  %v1428 = vlaneseq
  %v1429 = vshrl.u32 %v1428, 7
  %v1430 = vsub.s32 7, %v1429
  %v1431 = vrot.slane %v1161, %v1430
  %1433 = vbcast.lane.b32.xlu0 %v1431, 256
  %v1434 = vpop.permute.xlu0 %1433
  %v1435 = vmul.f32 %v1292, %v1329
  %v1436 = vmul.f32 %v1294, %v1336
  %v1437 = vmul.f32 %v1296, %v1343
  %v1438 = vmul.f32 %v1298, %v1350
  %v1439 = vmul.f32 %v1300, %v1357
  %v1440 = vmul.f32 %v1302, %v1364
  %v1441 = vmul.f32 %v1304, %v1371
  %v1442 = vmul.f32 %v1306, %v1378
  %v1443 = vmul.f32 %v1308, %v1385
  %v1444 = vmul.f32 %v1310, %v1392
  %v1445 = vmul.f32 %v1312, %v1399
  %v1446 = vmul.f32 %v1314, %v1406
  %v1447 = vmul.f32 %v1316, %v1413
  %v1448 = vmul.f32 %v1318, %v1420
  %v1449 = vmul.f32 %v1320, %v1427
  %v1450 = vmul.f32 %v1322, %v1434
  %v1451 = vsel %vm1162, %v1435, 0.0
  %v1452 = vrot.slane %v1451, 4
  %v1453 = vadd.f32 %v1451, %v1452
  %v1454 = vrot.slane %v1453, 2
  %v1455 = vadd.f32 %v1453, %v1454
  %v1456 = vrot.slane %v1455, 1
  %v1457 = vadd.f32 %v1455, %v1456
  %v1458 = vsel %vm1162, %v1436, 0.0
  %v1459 = vrot.slane %v1458, 4
  %v1460 = vadd.f32 %v1458, %v1459
  %v1461 = vrot.slane %v1460, 2
  %v1462 = vadd.f32 %v1460, %v1461
  %v1463 = vrot.slane %v1462, 1
  %v1464 = vadd.f32 %v1462, %v1463
  %v1465 = vsel %vm1162, %v1437, 0.0
  %v1466 = vrot.slane %v1465, 4
  %v1467 = vadd.f32 %v1465, %v1466
  %v1468 = vrot.slane %v1467, 2
  %v1469 = vadd.f32 %v1467, %v1468
  %v1470 = vrot.slane %v1469, 1
  %v1471 = vadd.f32 %v1469, %v1470
  %v1472 = vsel %vm1162, %v1438, 0.0
  %v1473 = vrot.slane %v1472, 4
  %v1474 = vadd.f32 %v1472, %v1473
  %v1475 = vrot.slane %v1474, 2
  %v1476 = vadd.f32 %v1474, %v1475
  %v1477 = vrot.slane %v1476, 1
  %v1478 = vadd.f32 %v1476, %v1477
  %v1479 = vsel %vm1162, %v1439, 0.0
  %v1480 = vrot.slane %v1479, 4
  %v1481 = vadd.f32 %v1479, %v1480
  %v1482 = vrot.slane %v1481, 2
  %v1483 = vadd.f32 %v1481, %v1482
  %v1484 = vrot.slane %v1483, 1
  %v1485 = vadd.f32 %v1483, %v1484
  %v1486 = vsel %vm1162, %v1440, 0.0
  %v1487 = vrot.slane %v1486, 4
  %v1488 = vadd.f32 %v1486, %v1487
  %v1489 = vrot.slane %v1488, 2
  %v1490 = vadd.f32 %v1488, %v1489
  %v1491 = vrot.slane %v1490, 1
  %v1492 = vadd.f32 %v1490, %v1491
  %v1493 = vsel %vm1162, %v1441, 0.0
  %v1494 = vrot.slane %v1493, 4
  %v1495 = vadd.f32 %v1493, %v1494
  %v1496 = vrot.slane %v1495, 2
  %v1497 = vadd.f32 %v1495, %v1496
  %v1498 = vrot.slane %v1497, 1
  %v1499 = vadd.f32 %v1497, %v1498
  %v1500 = vsel %vm1162, %v1442, 0.0
  %v1501 = vrot.slane %v1500, 4
  %v1502 = vadd.f32 %v1500, %v1501
  %v1503 = vrot.slane %v1502, 2
  %v1504 = vadd.f32 %v1502, %v1503
  %v1505 = vrot.slane %v1504, 1
  %v1506 = vadd.f32 %v1504, %v1505
  %v1507 = vsel %vm1162, %v1443, 0.0
  %v1508 = vrot.slane %v1507, 4
  %v1509 = vadd.f32 %v1507, %v1508
  %v1510 = vrot.slane %v1509, 2
  %v1511 = vadd.f32 %v1509, %v1510
  %v1512 = vrot.slane %v1511, 1
  %v1513 = vadd.f32 %v1511, %v1512
  %v1514 = vsel %vm1162, %v1444, 0.0
  %v1515 = vrot.slane %v1514, 4
  %v1516 = vadd.f32 %v1514, %v1515
  %v1517 = vrot.slane %v1516, 2
  %v1518 = vadd.f32 %v1516, %v1517
  %v1519 = vrot.slane %v1518, 1
  %v1520 = vadd.f32 %v1518, %v1519
  %v1521 = vsel %vm1162, %v1445, 0.0
  %v1522 = vrot.slane %v1521, 4
  %v1523 = vadd.f32 %v1521, %v1522
  %v1524 = vrot.slane %v1523, 2
  %v1525 = vadd.f32 %v1523, %v1524
  %v1526 = vrot.slane %v1525, 1
  %v1527 = vadd.f32 %v1525, %v1526
  %v1528 = vsel %vm1162, %v1446, 0.0
  %v1529 = vrot.slane %v1528, 4
  %v1530 = vadd.f32 %v1528, %v1529
  %v1531 = vrot.slane %v1530, 2
  %v1532 = vadd.f32 %v1530, %v1531
  %v1533 = vrot.slane %v1532, 1
  %v1534 = vadd.f32 %v1532, %v1533
  %v1535 = vsel %vm1162, %v1447, 0.0
  %v1536 = vrot.slane %v1535, 4
  %v1537 = vadd.f32 %v1535, %v1536
  %v1538 = vrot.slane %v1537, 2
  %v1539 = vadd.f32 %v1537, %v1538
  %v1540 = vrot.slane %v1539, 1
  %v1541 = vadd.f32 %v1539, %v1540
  %v1542 = vsel %vm1162, %v1448, 0.0
  %v1543 = vrot.slane %v1542, 4
  %v1544 = vadd.f32 %v1542, %v1543
  %v1545 = vrot.slane %v1544, 2
  %v1546 = vadd.f32 %v1544, %v1545
  %v1547 = vrot.slane %v1546, 1
  %v1548 = vadd.f32 %v1546, %v1547
  %v1549 = vsel %vm1162, %v1449, 0.0
  %v1550 = vrot.slane %v1549, 4
  %v1551 = vadd.f32 %v1549, %v1550
  %v1552 = vrot.slane %v1551, 2
  %v1553 = vadd.f32 %v1551, %v1552
  %v1554 = vrot.slane %v1553, 1
  %v1555 = vadd.f32 %v1553, %v1554
  %v1556 = vsel %vm1162, %v1450, 0.0
  %v1557 = vrot.slane %v1556, 4
  %v1558 = vadd.f32 %v1556, %v1557
  %v1559 = vrot.slane %v1558, 2
  %v1560 = vadd.f32 %v1558, %v1559
  %v1561 = vrot.slane %v1560, 1
  %v1562 = vadd.f32 %v1560, %v1561
  %v1563 = vrcp.pop %v1457
  %v1564 = vrcp.pop %v1464
  %v1565 = vrcp.pop %v1471
  %v1566 = vrcp.pop %v1478
  %v1567 = vrcp.pop %v1485
  %v1568 = vrcp.pop %v1492
  %v1569 = vrcp.pop %v1499
  %v1570 = vrcp.pop %v1506
  %v1571 = vrcp.pop %v1513
  %v1572 = vrcp.pop %v1520
  %v1573 = vrcp.pop %v1527
  %v1574 = vrcp.pop %v1534
  %v1575 = vrcp.pop %v1541
  %v1576 = vrcp.pop %v1548
  %v1577 = vrcp.pop %v1555
  %v1578 = vrcp.pop %v1562
  %v1579 = vmul.f32 %v1435, %v1563
  %v1580 = vmul.f32 %v1436, %v1564
  %v1581 = vmul.f32 %v1437, %v1565
  %v1582 = vmul.f32 %v1438, %v1566
  %v1583 = vmul.f32 %v1439, %v1567
  %v1584 = vmul.f32 %v1440, %v1568
  %v1585 = vmul.f32 %v1441, %v1569
  %v1586 = vmul.f32 %v1442, %v1570
  %v1587 = vmul.f32 %v1443, %v1571
  %v1588 = vmul.f32 %v1444, %v1572
  %v1589 = vmul.f32 %v1445, %v1573
  %v1590 = vmul.f32 %v1446, %v1574
  %v1591 = vmul.f32 %v1447, %v1575
  %v1592 = vmul.f32 %v1448, %v1576
  %v1593 = vmul.f32 %v1449, %v1577
  %v1594 = vmul.f32 %v1450, %v1578
  %1611 = vrot.lane.b32.xlu0 %v1579, 32
  %v1612 = vpop.permute.xlu0 %1611
  %1613 = vrot.lane.b32.xlu0 %v1580, 32
  %v1614 = vpop.permute.xlu0 %1613
  %1615 = vrot.lane.b32.xlu0 %v1581, 32
  %v1616 = vpop.permute.xlu0 %1615
  %1617 = vrot.lane.b32.xlu0 %v1582, 32
  %v1618 = vpop.permute.xlu0 %1617
  %1619 = vrot.lane.b32.xlu0 %v1583, 32
  %v1620 = vpop.permute.xlu0 %1619
  %1621 = vrot.lane.b32.xlu0 %v1584, 32
  %v1622 = vpop.permute.xlu0 %1621
  %1623 = vrot.lane.b32.xlu0 %v1585, 32
  %v1624 = vpop.permute.xlu0 %1623
  %1625 = vrot.lane.b32.xlu0 %v1586, 32
  %v1626 = vpop.permute.xlu0 %1625
  %1627 = vrot.lane.b32.xlu0 %v1587, 32
  %v1628 = vpop.permute.xlu0 %1627
  %1629 = vrot.lane.b32.xlu0 %v1588, 32
  %v1630 = vpop.permute.xlu0 %1629
  %1631 = vrot.lane.b32.xlu0 %v1589, 32
  %v1632 = vpop.permute.xlu0 %1631
  %1633 = vrot.lane.b32.xlu0 %v1590, 32
  %v1634 = vpop.permute.xlu0 %1633
  %1635 = vrot.lane.b32.xlu0 %v1591, 32
  %v1636 = vpop.permute.xlu0 %1635
  %1637 = vrot.lane.b32.xlu0 %v1592, 32
  %v1638 = vpop.permute.xlu0 %1637
  %1639 = vrot.lane.b32.xlu0 %v1593, 32
  %v1640 = vpop.permute.xlu0 %1639
  %1641 = vrot.lane.b32.xlu0 %v1594, 32
  %v1642 = vpop.permute.xlu0 %1641
  %v1659 = vmul.f32 %v149, %v1612
  %v1660 = vmul.f32 %v149, %v1614
  %v1661 = vmul.f32 %v149, %v1616
  %v1662 = vmul.f32 %v149, %v1618
  %v1663 = vmul.f32 %v149, %v1620
  %v1664 = vmul.f32 %v149, %v1622
  %v1665 = vmul.f32 %v149, %v1624
  %v1666 = vmul.f32 %v149, %v1626
  %v1667 = vmul.f32 %v154, %v1628
  %v1668 = vmul.f32 %v154, %v1630
  %v1669 = vmul.f32 %v154, %v1632
  %v1670 = vmul.f32 %v154, %v1634
  %v1671 = vmul.f32 %v154, %v1636
  %v1672 = vmul.f32 %v154, %v1638
  %v1673 = vmul.f32 %v154, %v1640
  %v1674 = vmul.f32 %v154, %v1642
  %vm1675 = vcmask 785920
  %v1676 = vsel %vm1675, %v1659, 0.0
  %v1677 = vrot.slane %v1676, 4
  %v1678 = vadd.f32 %v1676, %v1677
  %v1679 = vrot.slane %v1678, 2
  %v1680 = vadd.f32 %v1678, %v1679
  %v1681 = vrot.slane %v1680, 1
  %v1682 = vadd.f32 %v1680, %v1681
  %v1683 = vsel %vm1675, %v1660, 0.0
  %v1684 = vrot.slane %v1683, 4
  %v1685 = vadd.f32 %v1683, %v1684
  %v1686 = vrot.slane %v1685, 2
  %v1687 = vadd.f32 %v1685, %v1686
  %v1688 = vrot.slane %v1687, 1
  %v1689 = vadd.f32 %v1687, %v1688
  %v1690 = vsel %vm1675, %v1661, 0.0
  %v1691 = vrot.slane %v1690, 4
  %v1692 = vadd.f32 %v1690, %v1691
  %v1693 = vrot.slane %v1692, 2
  %v1694 = vadd.f32 %v1692, %v1693
  %v1695 = vrot.slane %v1694, 1
  %v1696 = vadd.f32 %v1694, %v1695
  %v1697 = vsel %vm1675, %v1662, 0.0
  %v1698 = vrot.slane %v1697, 4
  %v1699 = vadd.f32 %v1697, %v1698
  %v1700 = vrot.slane %v1699, 2
  %v1701 = vadd.f32 %v1699, %v1700
  %v1702 = vrot.slane %v1701, 1
  %v1703 = vadd.f32 %v1701, %v1702
  %v1704 = vsel %vm1675, %v1663, 0.0
  %v1705 = vrot.slane %v1704, 4
  %v1706 = vadd.f32 %v1704, %v1705
  %v1707 = vrot.slane %v1706, 2
  %v1708 = vadd.f32 %v1706, %v1707
  %v1709 = vrot.slane %v1708, 1
  %v1710 = vadd.f32 %v1708, %v1709
  %v1711 = vsel %vm1675, %v1664, 0.0
  %v1712 = vrot.slane %v1711, 4
  %v1713 = vadd.f32 %v1711, %v1712
  %v1714 = vrot.slane %v1713, 2
  %v1715 = vadd.f32 %v1713, %v1714
  %v1716 = vrot.slane %v1715, 1
  %v1717 = vadd.f32 %v1715, %v1716
  %v1718 = vsel %vm1675, %v1665, 0.0
  %v1719 = vrot.slane %v1718, 4
  %v1720 = vadd.f32 %v1718, %v1719
  %v1721 = vrot.slane %v1720, 2
  %v1722 = vadd.f32 %v1720, %v1721
  %v1723 = vrot.slane %v1722, 1
  %v1724 = vadd.f32 %v1722, %v1723
  %v1725 = vsel %vm1675, %v1666, 0.0
  %v1726 = vrot.slane %v1725, 4
  %v1727 = vadd.f32 %v1725, %v1726
  %v1728 = vrot.slane %v1727, 2
  %v1729 = vadd.f32 %v1727, %v1728
  %v1730 = vrot.slane %v1729, 1
  %v1731 = vadd.f32 %v1729, %v1730
  %v1732 = vsel %vm1675, %v1667, 0.0
  %v1733 = vrot.slane %v1732, 4
  %v1734 = vadd.f32 %v1732, %v1733
  %v1735 = vrot.slane %v1734, 2
  %v1736 = vadd.f32 %v1734, %v1735
  %v1737 = vrot.slane %v1736, 1
  %v1738 = vadd.f32 %v1736, %v1737
  %v1739 = vsel %vm1675, %v1668, 0.0
  %v1740 = vrot.slane %v1739, 4
  %v1741 = vadd.f32 %v1739, %v1740
  %v1742 = vrot.slane %v1741, 2
  %v1743 = vadd.f32 %v1741, %v1742
  %v1744 = vrot.slane %v1743, 1
  %v1745 = vadd.f32 %v1743, %v1744
  %v1746 = vsel %vm1675, %v1669, 0.0
  %v1747 = vrot.slane %v1746, 4
  %v1748 = vadd.f32 %v1746, %v1747
  %v1749 = vrot.slane %v1748, 2
  %v1750 = vadd.f32 %v1748, %v1749
  %v1751 = vrot.slane %v1750, 1
  %v1752 = vadd.f32 %v1750, %v1751
  %v1753 = vsel %vm1675, %v1670, 0.0
  %v1754 = vrot.slane %v1753, 4
  %v1755 = vadd.f32 %v1753, %v1754
  %v1756 = vrot.slane %v1755, 2
  %v1757 = vadd.f32 %v1755, %v1756
  %v1758 = vrot.slane %v1757, 1
  %v1759 = vadd.f32 %v1757, %v1758
  %v1760 = vsel %vm1675, %v1671, 0.0
  %v1761 = vrot.slane %v1760, 4
  %v1762 = vadd.f32 %v1760, %v1761
  %v1763 = vrot.slane %v1762, 2
  %v1764 = vadd.f32 %v1762, %v1763
  %v1765 = vrot.slane %v1764, 1
  %v1766 = vadd.f32 %v1764, %v1765
  %v1767 = vsel %vm1675, %v1672, 0.0
  %v1768 = vrot.slane %v1767, 4
  %v1769 = vadd.f32 %v1767, %v1768
  %v1770 = vrot.slane %v1769, 2
  %v1771 = vadd.f32 %v1769, %v1770
  %v1772 = vrot.slane %v1771, 1
  %v1773 = vadd.f32 %v1771, %v1772
  %v1774 = vsel %vm1675, %v1673, 0.0
  %v1775 = vrot.slane %v1774, 4
  %v1776 = vadd.f32 %v1774, %v1775
  %v1777 = vrot.slane %v1776, 2
  %v1778 = vadd.f32 %v1776, %v1777
  %v1779 = vrot.slane %v1778, 1
  %v1780 = vadd.f32 %v1778, %v1779
  %v1781 = vsel %vm1675, %v1674, 0.0
  %v1782 = vrot.slane %v1781, 4
  %v1783 = vadd.f32 %v1781, %v1782
  %v1784 = vrot.slane %v1783, 2
  %v1785 = vadd.f32 %v1783, %v1784
  %v1786 = vrot.slane %v1785, 1
  %v1787 = vadd.f32 %v1785, %v1786
  %v1788 = vlaneseq
  %v1789 = vshrl.u32 %v1788, 7
  %v1790 = vsub.s32 0, %v1789
  %v1791 = vrot.slane %v64, %v1790
  %v1808 = vsel %vm326, %v1689, %v1682
  %v1809 = vsel %vm327, %v1696, %v1808
  %v1810 = vsel %vm329, %v1703, %v1809
  %v1811 = vsel %vm331, %v1710, %v1810
  %v1812 = vsel %vm333, %v1717, %v1811
  %v1813 = vsel %vm335, %v1724, %v1812
  %v1814 = vsel %vm337, %v1731, %v1813
  %v1815 = vsel %vm326, %v1745, %v1738
  %v1816 = vsel %vm327, %v1752, %v1815
  %v1817 = vsel %vm329, %v1759, %v1816
  %v1818 = vsel %vm331, %v1766, %v1817
  %v1819 = vsel %vm333, %v1773, %v1818
  %v1820 = vsel %vm335, %v1780, %v1819
  %v1821 = vsel %vm337, %v1787, %v1820
  %1822 = vrot.lane.b32.xlu0 %v1814, 64
  %v1823 = vpop.permute.xlu0 %1822
  %1824 = vrot.lane.b32.xlu0 %v1821, 64
  %v1825 = vpop.permute.xlu0 %1824
  %1830 = vrot.lane.b32.xlu0 %v28, 32
  %v1831 = vpop.permute.xlu0 %1830
  %1832 = vrot.lane.b32.xlu0 %v29, 32
  %v1833 = vpop.permute.xlu0 %1832
  %1834 = vrot.lane.b32.xlu0 %v30, 32
  %v1835 = vpop.permute.xlu0 %1834
  %1836 = vrot.lane.b32.xlu0 %v31, 32
  %v1837 = vpop.permute.xlu0 %1836
  %v1842 = vsel %vm75, %v1823, 0
  %v1844 = vsel %vm75, %v1825, 0
  %1846 = vmatprep.subr.mxu0 0.0
  %1847 = vmatpush1.msra.mxu0 0.0
  %1848 = vmatprep.subr.mxu0 0.0
  %1849 = vmatpush1.msra.mxu0 0.0
  %1850 = vmatprep.subr.mxu0 0.0
  %1851 = vmatpush1.msra.mxu0 0.0
  %1852 = vmatprep.subr.mxu0 0.0
  %1853 = vmatpush1.msra.mxu0 0.0
  %1854 = vmatprep.subr.mxu0 0.0
  %1855 = vmatpush1.msra.mxu0 0.0
  %1856 = vmatprep.subr.mxu0 0.0
  %1857 = vmatpush1.msra.mxu0 0.0
  %1858 = vmatprep.subr.mxu0 0.0
  %1859 = vmatpush1.msra.mxu0 0.0
  %1860 = vmatprep.subr.mxu0 0.0
  %1861 = vmatpush1.msra.mxu0 0.0
  %1862 = vmatprep.subr.mxu0 0.0
  %1863 = vmatpush1.msra.mxu0 0.0
  %1864 = vmatprep.subr.mxu0 0.0
  %1865 = vmatpush1.msra.mxu0 0.0
  %1866 = vmatprep.subr.mxu0 0.0
  %1867 = vmatpush1.msra.mxu0 0.0
  %1868 = vmatprep.subr.mxu0 0.0
  %1869 = vmatpush1.msra.mxu0 0.0
  %1870 = vmatprep.subr.mxu0 0.0
  %1871 = vmatpush1.msra.mxu0 %v1837
  %1872 = vmatprep.subr.mxu0 0.0
  %1873 = vmatpush1.msra.mxu0 %v1835
  %1874 = vmatprep.subr.mxu0 0.0
  %1875 = vmatpush1.msra.mxu0 %v1833
  %1876 = vmatprep.subr.mxu0 0.0
  %1877 = vmatpush1.msra.mxu0 %v1831
  %1878 = vmatprep.subr.mxu0 0.0
  %1879 = vmatpush2.msra.mxu0 0.0
  %1880 = vmatprep.subr.mxu0 0.0
  %1881 = vmatpush2.msra.mxu0 0.0
  %1882 = vmatprep.subr.mxu0 0.0
  %1883 = vmatpush2.msra.mxu0 0.0
  %1884 = vmatprep.subr.mxu0 0.0
  %1885 = vmatpush2.msra.mxu0 0.0
  %1886 = vmatprep.subr.mxu0 0.0
  %1887 = vmatpush2.msra.mxu0 0.0
  %1888 = vmatprep.subr.mxu0 0.0
  %1889 = vmatpush2.msra.mxu0 0.0
  %1890 = vmatprep.subr.mxu0 0.0
  %1891 = vmatpush2.msra.mxu0 0.0
  %1892 = vmatprep.subr.mxu0 0.0
  %1893 = vmatpush2.msra.mxu0 0.0
  %1894 = vmatprep.subr.mxu0 0.0
  %1895 = vmatpush2.msra.mxu0 0.0
  %1896 = vmatprep.subr.mxu0 0.0
  %1897 = vmatpush2.msra.mxu0 0.0
  %1898 = vmatprep.subr.mxu0 0.0
  %1899 = vmatpush2.msra.mxu0 0.0
  %1900 = vmatprep.subr.mxu0 0.0
  %1901 = vmatpush2.msra.mxu0 0.0
  %1902 = vmatprep.subr.mxu0 0.0
  %1903 = vmatpush2.msra.mxu0 0.0
  %1904 = vmatprep.subr.mxu0 0.0
  %1905 = vmatpush2.msra.mxu0 0.0
  %1906 = vmatprep.subr.mxu0 0.0
  %1907 = vmatpush2.msra.mxu0 0.0
  %1908 = vmatprep.subr.mxu0 0.0
  %1909 = vmatpush2.msra.mxu0 0.0
  %1910 = vmatprep.mubr.f32.mxu0 0.0
  %1911 = vmatmul.mubr.f32.gmra.mxu0 %v1842
  %v1912 = vpop.f32.mrf.mxu0
  %v1913 = vadd.f32 %v1791, %v1912
  %v1914 = vpop.f32.mrf.mxu0
  %1915 = vmatprep.mubr.f32.mxu0 0.0
  %1916 = vmatmul.mubr.f32.gmra.mxu0 %v1844
  %v1917 = vpop.f32.mrf.mxu0
  %v1918 = vadd.f32 %v1791, %v1917
  %v1919 = vpop.f32.mrf.mxu0
  %1920 = vdwg.mxu0
  %v1921 = vadd.f32 %v23, %v1913
  %v1922 = vadd.f32 %v24, %v1918
  %v1923 = vsel %vm75, %v1921, 0.0
  %1924 = vadd.xlane.f32.xlu0 %v1923
  %v1925 = vpop.xlane.xlu0 %1924
  %v1926 = vsel %vm75, %v1922, 0.0
  %1927 = vadd.xlane.f32.xlu0 %v1926
  %v1928 = vpop.xlane.xlu0 %1927
  %v1929 = vrcp.pop 32.0
  %v1930 = vmul.f32 %v1925, %v1929
  %v1931 = vmul.f32 %v1928, %v1929
  %v1932 = vsub.f32 %v1921, %v1930
  %v1933 = vsub.f32 %v1922, %v1931
  %v1934 = vmul.f32 %v1932, %v1932
  %v1935 = vmul.f32 %v1933, %v1933
  %v1936 = vsel %vm75, %v1934, 0.0
  %1937 = vadd.xlane.f32.xlu0 %v1936
  %v1938 = vpop.xlane.xlu0 %1937
  %v1939 = vsel %vm75, %v1935, 0.0
  %1940 = vadd.xlane.f32.xlu0 %v1939
  %v1941 = vpop.xlane.xlu0 %1940
  %v1942 = vmul.f32 %v1938, %v1929
  %v1943 = vmul.f32 %v1941, %v1929
  %v1944 = vadd.f32 %v1942, 1e-05
  %v1945 = vadd.f32 %v1943, 1e-05
  %v1946 = vrsqrt.pop %v1944
  %v1947 = vrsqrt.pop %v1945
  %v1948 = vmul.f32 %v1932, %v1946
  %v1949 = vmul.f32 %v1933, %v1947
  %v1950 = vlaneseq
  %v1951 = vshrl.u32 %v1950, 7
  %v1952 = vsub.s32 0, %v1951
  %v1953 = vrot.slane %v67, %v1952
  %v1954 = vmul.f32 %v1948, %v1953
  %v1955 = vmul.f32 %v1949, %v1953
  %v1956 = vlaneseq
  %v1957 = vshrl.u32 %v1956, 7
  %v1958 = vsub.s32 0, %v1957
  %v1959 = vrot.slane %v68, %v1958
  %v1960 = vadd.f32 %v1954, %v1959
  %v1961 = vadd.f32 %v1955, %v1959
  %v1962 = vlaneseq
  %v1963 = vshrl.u32 %v1962, 7
  %v1964 = vsub.s32 0, %v1963
  %v1965 = vrot.slane %v65, %v1964
  %v1967 = vsel %vm75, %v1960, 0
  %v1970 = vsel %vm75, %v1961, 0
  %1972 = vmatprep.subr.mxu0 0.0
  %1973 = vmatpush1.msra.mxu0 0.0
  %1974 = vmatprep.subr.mxu0 0.0
  %1975 = vmatpush1.msra.mxu0 0.0
  %1976 = vmatprep.subr.mxu0 0.0
  %1977 = vmatpush1.msra.mxu0 0.0
  %1978 = vmatprep.subr.mxu0 0.0
  %1979 = vmatpush1.msra.mxu0 0.0
  %1980 = vmatprep.subr.mxu0 0.0
  %1981 = vmatpush1.msra.mxu0 0.0
  %1982 = vmatprep.subr.mxu0 0.0
  %1983 = vmatpush1.msra.mxu0 0.0
  %1984 = vmatprep.subr.mxu0 0.0
  %1985 = vmatpush1.msra.mxu0 0.0
  %1986 = vmatprep.subr.mxu0 0.0
  %1987 = vmatpush1.msra.mxu0 0.0
  %1988 = vmatprep.subr.mxu0 0.0
  %1989 = vmatpush1.msra.mxu0 0.0
  %1990 = vmatprep.subr.mxu0 0.0
  %1991 = vmatpush1.msra.mxu0 0.0
  %1992 = vmatprep.subr.mxu0 0.0
  %1993 = vmatpush1.msra.mxu0 0.0
  %1994 = vmatprep.subr.mxu0 0.0
  %1995 = vmatpush1.msra.mxu0 0.0
  %1996 = vmatprep.subr.mxu0 0.0
  %1997 = vmatpush1.msra.mxu0 %v35
  %1998 = vmatprep.subr.mxu0 0.0
  %1999 = vmatpush1.msra.mxu0 %v34
  %2000 = vmatprep.subr.mxu0 0.0
  %2001 = vmatpush1.msra.mxu0 %v33
  %2002 = vmatprep.subr.mxu0 0.0
  %2003 = vmatpush1.msra.mxu0 %v32
  %2004 = vmatprep.subr.mxu0 0.0
  %2005 = vmatpush2.msra.mxu0 0.0
  %2006 = vmatprep.subr.mxu0 0.0
  %2007 = vmatpush2.msra.mxu0 0.0
  %2008 = vmatprep.subr.mxu0 0.0
  %2009 = vmatpush2.msra.mxu0 0.0
  %2010 = vmatprep.subr.mxu0 0.0
  %2011 = vmatpush2.msra.mxu0 0.0
  %2012 = vmatprep.subr.mxu0 0.0
  %2013 = vmatpush2.msra.mxu0 0.0
  %2014 = vmatprep.subr.mxu0 0.0
  %2015 = vmatpush2.msra.mxu0 0.0
  %2016 = vmatprep.subr.mxu0 0.0
  %2017 = vmatpush2.msra.mxu0 0.0
  %2018 = vmatprep.subr.mxu0 0.0
  %2019 = vmatpush2.msra.mxu0 0.0
  %2020 = vmatprep.subr.mxu0 0.0
  %2021 = vmatpush2.msra.mxu0 0.0
  %2022 = vmatprep.subr.mxu0 0.0
  %2023 = vmatpush2.msra.mxu0 0.0
  %2024 = vmatprep.subr.mxu0 0.0
  %2025 = vmatpush2.msra.mxu0 0.0
  %2026 = vmatprep.subr.mxu0 0.0
  %2027 = vmatpush2.msra.mxu0 0.0
  %2028 = vmatprep.subr.mxu0 0.0
  %2029 = vmatpush2.msra.mxu0 0.0
  %2030 = vmatprep.subr.mxu0 0.0
  %2031 = vmatpush2.msra.mxu0 0.0
  %2032 = vmatprep.subr.mxu0 0.0
  %2033 = vmatpush2.msra.mxu0 0.0
  %2034 = vmatprep.subr.mxu0 0.0
  %2035 = vmatpush2.msra.mxu0 0.0
  %2036 = vmatprep.mubr.f32.mxu0 0.0
  %2037 = vmatmul.mubr.f32.gmra.mxu0 %v1967
  %v2038 = vpop.f32.mrf.mxu0
  %v2039 = vadd.f32 %v1965, %v2038
  %v2040 = vpop.f32.mrf.mxu0
  %2041 = vmatprep.mubr.f32.mxu0 0.0
  %2042 = vmatmul.mubr.f32.gmra.mxu0 %v1970
  %v2043 = vpop.f32.mrf.mxu0
  %v2044 = vadd.f32 %v1965, %v2043
  %v2045 = vpop.f32.mrf.mxu0
  %2046 = vdwg.mxu0
  %v2047 = vmax.f32 %v2039, 0.0
  %v2048 = vmax.f32 %v2044, 0.0
  %v2049 = vlaneseq
  %v2050 = vshrl.u32 %v2049, 7
  %v2051 = vsub.s32 0, %v2050
  %v2052 = vrot.slane %v66, %v2051
  %vm2053 = vcmask 523264
  %v2055 = vsel %vm2053, %v2047, 0
  %v2058 = vsel %vm2053, %v2048, 0
  %2060 = vmatprep.subr.mxu0 0.0
  %2061 = vmatpush1.msra.mxu0 0.0
  %2062 = vmatprep.subr.mxu0 0.0
  %2063 = vmatpush1.msra.mxu0 0.0
  %2064 = vmatprep.subr.mxu0 0.0
  %2065 = vmatpush1.msra.mxu0 0.0
  %2066 = vmatprep.subr.mxu0 0.0
  %2067 = vmatpush1.msra.mxu0 0.0
  %2068 = vmatprep.subr.mxu0 0.0
  %2069 = vmatpush1.msra.mxu0 0.0
  %2070 = vmatprep.subr.mxu0 0.0
  %2071 = vmatpush1.msra.mxu0 0.0
  %2072 = vmatprep.subr.mxu0 0.0
  %2073 = vmatpush1.msra.mxu0 0.0
  %2074 = vmatprep.subr.mxu0 0.0
  %2075 = vmatpush1.msra.mxu0 0.0
  %2076 = vmatprep.subr.mxu0 0.0
  %2077 = vmatpush1.msra.mxu0 %v59
  %2078 = vmatprep.subr.mxu0 0.0
  %2079 = vmatpush1.msra.mxu0 %v58
  %2080 = vmatprep.subr.mxu0 0.0
  %2081 = vmatpush1.msra.mxu0 %v57
  %2082 = vmatprep.subr.mxu0 0.0
  %2083 = vmatpush1.msra.mxu0 %v56
  %2084 = vmatprep.subr.mxu0 0.0
  %2085 = vmatpush1.msra.mxu0 %v55
  %2086 = vmatprep.subr.mxu0 0.0
  %2087 = vmatpush1.msra.mxu0 %v54
  %2088 = vmatprep.subr.mxu0 0.0
  %2089 = vmatpush1.msra.mxu0 %v53
  %2090 = vmatprep.subr.mxu0 0.0
  %2091 = vmatpush1.msra.mxu0 %v52
  %2092 = vmatprep.subr.mxu0 0.0
  %2093 = vmatpush2.msra.mxu0 0.0
  %2094 = vmatprep.subr.mxu0 0.0
  %2095 = vmatpush2.msra.mxu0 0.0
  %2096 = vmatprep.subr.mxu0 0.0
  %2097 = vmatpush2.msra.mxu0 0.0
  %2098 = vmatprep.subr.mxu0 0.0
  %2099 = vmatpush2.msra.mxu0 0.0
  %2100 = vmatprep.subr.mxu0 0.0
  %2101 = vmatpush2.msra.mxu0 0.0
  %2102 = vmatprep.subr.mxu0 0.0
  %2103 = vmatpush2.msra.mxu0 0.0
  %2104 = vmatprep.subr.mxu0 0.0
  %2105 = vmatpush2.msra.mxu0 0.0
  %2106 = vmatprep.subr.mxu0 0.0
  %2107 = vmatpush2.msra.mxu0 0.0
  %2108 = vmatprep.subr.mxu0 0.0
  %2109 = vmatpush2.msra.mxu0 0.0
  %2110 = vmatprep.subr.mxu0 0.0
  %2111 = vmatpush2.msra.mxu0 0.0
  %2112 = vmatprep.subr.mxu0 0.0
  %2113 = vmatpush2.msra.mxu0 0.0
  %2114 = vmatprep.subr.mxu0 0.0
  %2115 = vmatpush2.msra.mxu0 0.0
  %2116 = vmatprep.subr.mxu0 0.0
  %2117 = vmatpush2.msra.mxu0 0.0
  %2118 = vmatprep.subr.mxu0 0.0
  %2119 = vmatpush2.msra.mxu0 0.0
  %2120 = vmatprep.subr.mxu0 0.0
  %2121 = vmatpush2.msra.mxu0 0.0
  %2122 = vmatprep.subr.mxu0 0.0
  %2123 = vmatpush2.msra.mxu0 0.0
  %2124 = vmatprep.mubr.f32.mxu0 0.0
  %2125 = vmatmul.mubr.f32.gmra.mxu0 %v2055
  %v2126 = vpop.f32.mrf.mxu0
  %v2127 = vadd.f32 %v2052, %v2126
  %v2128 = vpop.f32.mrf.mxu0
  %2129 = vmatprep.mubr.f32.mxu0 0.0
  %2130 = vmatmul.mubr.f32.gmra.mxu0 %v2058
  %v2131 = vpop.f32.mrf.mxu0
  %v2132 = vadd.f32 %v2052, %v2131
  %v2133 = vpop.f32.mrf.mxu0
  %2134 = vdwg.mxu0
  %v2135 = vadd.f32 %v1960, %v2127
  %v2136 = vadd.f32 %v1961, %v2132
  %v2137 = vsel %vm75, %v2135, 0.0
  %2138 = vadd.xlane.f32.xlu0 %v2137
  %v2139 = vpop.xlane.xlu0 %2138
  %v2140 = vsel %vm75, %v2136, 0.0
  %2141 = vadd.xlane.f32.xlu0 %v2140
  %v2142 = vpop.xlane.xlu0 %2141
  %v2143 = vmul.f32 %v2139, %v1929
  %v2144 = vmul.f32 %v2142, %v1929
  %v2145 = vsub.f32 %v2135, %v2143
  %v2146 = vsub.f32 %v2136, %v2144
  %v2147 = vmul.f32 %v2145, %v2145
  %v2148 = vmul.f32 %v2146, %v2146
  %v2149 = vsel %vm75, %v2147, 0.0
  %2150 = vadd.xlane.f32.xlu0 %v2149
  %v2151 = vpop.xlane.xlu0 %2150
  %v2152 = vsel %vm75, %v2148, 0.0
  %2153 = vadd.xlane.f32.xlu0 %v2152
  %v2154 = vpop.xlane.xlu0 %2153
  %v2155 = vmul.f32 %v2151, %v1929
  %v2156 = vmul.f32 %v2154, %v1929
  %v2157 = vadd.f32 %v2155, 1e-05
  %v2158 = vadd.f32 %v2156, 1e-05
  %v2159 = vrsqrt.pop %v2157
  %v2160 = vrsqrt.pop %v2158
  %v2161 = vmul.f32 %v2145, %v2159
  %v2162 = vmul.f32 %v2146, %v2160
  %v2163 = vlaneseq
  %v2164 = vshrl.u32 %v2163, 7
  %v2165 = vsub.s32 0, %v2164
  %v2166 = vrot.slane %v69, %v2165
  %v2167 = vmul.f32 %v2161, %v2166
  %v2168 = vmul.f32 %v2162, %v2166
  %v2169 = vlaneseq
  %v2170 = vshrl.u32 %v2169, 7
  %v2171 = vsub.s32 0, %v2170
  %v2172 = vrot.slane %v70, %v2171
  %v2173 = vadd.f32 %v2167, %v2172
  %v2174 = vadd.f32 %v2168, %v2172
  %v2177 = vrot.slane %v2174, 7
  %v2178 = vsel %vm326, %v2177, %v2173
  %v2180 = vrot.slane %v2173, 1
  %v2181 = vsel %vm326, %v2174, %v2180
  %2182 = vrot.lane.b32.xlu0 %v2181, 32
  %v2183 = vpop.permute.xlu0 %2182
  %v2185 = vrot.slane %v2173, 2
  %v2186 = vrot.slane %v2174, 1
  %v2187 = vsel %vm326, %v2186, %v2185
  %2188 = vrot.lane.b32.xlu0 %v2187, 64
  %v2189 = vpop.permute.xlu0 %2188
  %v2191 = vrot.slane %v2173, 3
  %v2192 = vrot.slane %v2174, 2
  %v2193 = vsel %vm326, %v2192, %v2191
  %2194 = vrot.lane.b32.xlu0 %v2193, 96
  %v2195 = vpop.permute.xlu0 %2194
  %v2197 = vrot.slane %v2173, 4
  %v2198 = vrot.slane %v2174, 3
  %v2199 = vsel %vm326, %v2198, %v2197
  %v2201 = vrot.slane %v2173, 5
  %v2202 = vrot.slane %v2174, 4
  %v2203 = vsel %vm326, %v2202, %v2201
  %2204 = vrot.lane.b32.xlu0 %v2203, 32
  %v2205 = vpop.permute.xlu0 %2204
  %v2207 = vrot.slane %v2173, 6
  %v2208 = vrot.slane %v2174, 5
  %v2209 = vsel %vm326, %v2208, %v2207
  %2210 = vrot.lane.b32.xlu0 %v2209, 64
  %v2211 = vpop.permute.xlu0 %2210
  %v2213 = vrot.slane %v2173, 7
  %v2214 = vrot.slane %v2174, 6
  %v2215 = vsel %vm326, %v2214, %v2213
  %2216 = vrot.lane.b32.xlu0 %v2215, 96
  %v2217 = vpop.permute.xlu0 %2216
  %v2219 = vsel %vm75, %v2178, %v2183
  %v2220 = vsel %vm2053, %v2219, %v2189
  %vm2221 = vcmask 785408
  %v2222 = vsel %vm2221, %v2220, %v2195
  %v2223 = vsel %vm75, %v2199, %v2205
  %v2224 = vsel %vm2053, %v2223, %v2211
  %v2225 = vsel %vm2221, %v2224, %v2217
  %v2228 = vcombine.low %v2222, %v2225
  %v2230 = vunpack.c.l.s4 1983009808
  %v2231 = vunpack.c.0.s8 %v2230
  %v2232 = vlaneseq
  %v2233 = vshrl.u32 %v2232, 7
  %v2234 = vsub.s32 %v2231, %v2233
  %v2235 = vrot.slane %v2228, %v2234
  %2237 = vst [vmem:[%s6] sm:$0xf] %v2235
  // Predicated region
  $region26: #{distance_transformer_layer.1} parent=0 // pred_check
    _
  $region27: #{distance_transformer_layer.1} parent=0 // pred_check_branch
    %2239 = sbr.rel (0) target = $region29
  $region28: #{distance_transformer_layer.1} parent=0 // pred_region
    _
  $region29: #{distance_transformer_layer.1} parent=0 // pred_fallthru
    _
  // Predicated region
  $region30: #{distance_transformer_layer.1} parent=0 // pred_check
    _
  $region31: #{distance_transformer_layer.1} parent=0 // pred_check_branch
    %2241 = sbr.rel (0) target = $region33
  $region32: #{distance_transformer_layer.1} parent=0 // pred_region
    _
  $region33: #{distance_transformer_layer.1} parent=0 // pred_fallthru
    _

</llo_original>
